<compile_context>
chip_gen: v7x
topology: tpu7x:2x2x1
jax: 0.10.0
libtpu: 0.0.40
codegen_flags: <defaults>
</compile_context>

<pallas_src>
import functools

import jax
import jax.numpy as jnp
from jax.experimental import pallas as pl
from jax.experimental.pallas import tpu as pltpu

EPS = 1e-12        # pooling eps (matches the module's self.eps)
BN_EPS = 1e-5      # torch.nn.BatchNorm1d default eps
NEG_BIG = -1.0e30  # finite stand-in for -inf in the masked softmax


# --------------------------------------------------------------------------
# hardware queries
# --------------------------------------------------------------------------
def _bf16_eup_supported():
    """bf16 transcendentals only pay off on v6e/v7x (v5e and older: f32-only EUP)."""
    try:
        kind = jax.devices()[0].device_kind.lower()
    except Exception:
        return True
    return not any(v in kind for v in ("v2", "v3", "v4", "v5"))


def _vmem_budget_bytes():
    """Usable VMEM: physical capacity (128 MiB v5e/v6e, 64 MiB v7x) minus headroom."""
    cap = None
    try:
        cap = int(pltpu.get_tpu_info().vmem_capacity_bytes)
    except Exception:
        cap = None
    if not cap:
        try:
            kind = jax.devices()[0].device_kind.lower()
        except Exception:
            kind = ""
        cap = (64 << 20) if "7" in kind else (128 << 20)
    return cap - (16 << 20)


# --------------------------------------------------------------------------
# shared kernel pieces
# --------------------------------------------------------------------------
def _bias_column(gmean, gstd, w1ms_ref, abias_ref):
    """W1 columns acting on the time-constant [mean; std] rows reduce to a per-row
    bias.  Done as a VPU multiply + cross-lane reduce, not a lane-width-1 MXU dot."""
    gms = jnp.concatenate([gmean, gstd], axis=0).T                       # [1, 2C]
    return jnp.sum(w1ms_ref[...] * gms, axis=-1, keepdims=True) + abias_ref[:, 0:1]


def _attention_scores(xb, w1x_ref, w2_ref, abias_ref, b2_ref, bias_col, mask, bf16_eup):
    """1x1-conv TDNN + ReLU + folded BN + tanh + 1x1 conv -> masked scores, one x tile."""
    h = jnp.dot(w1x_ref[...], xb, preferred_element_type=jnp.float32) + bias_col  # [A, Lt]
    h = jnp.maximum(h, 0.0) * abias_ref[:, 1:2] + abias_ref[:, 2:3]               # ReLU + BN
    if bf16_eup:
        hb = jnp.tanh(h.astype(jnp.bfloat16))          # bf16 EUP tanh, feeds MXU directly
    else:
        hb = jnp.tanh(h).astype(jnp.bfloat16)          # v5e: f32 tanh, cast only for MXU
    scores = jnp.dot(w2_ref[...], hb, preferred_element_type=jnp.float32) + b2_ref[...]
    return jnp.where(mask, scores, NEG_BIG)                                        # [C, Lt]


def _store_stats(out_ref, mean, std):
    # lane-dense [2, C] store (wrapper reshapes to [N, 2C, 1])
    out_ref[0] = jnp.concatenate([mean, std], axis=1).T


# --------------------------------------------------------------------------
# resident kernel: whole bf16 [C, Lp] x tile stays in VMEM, one step per batch
# --------------------------------------------------------------------------
def asp_resident_kernel(lens_ref, x_ref, w1x_ref, w1ms_ref, abias_ref, w2_ref, b2_ref,
                        out_ref, *, bf16_eup):
    b = pl.program_id(0)
    nvalid = lens_ref[b]                                  # int32 valid-frame count
    xb = x_ref[0]                                         # [C, Lp] bf16
    Lp = xb.shape[-1]

    idx = jax.lax.broadcasted_iota(jnp.int32, (1, Lp), 1)
    mask = idx < nvalid                                   # [1, Lp] bool
    maskf = mask.astype(jnp.float32)
    inv_total = 1.0 / nvalid.astype(jnp.float32)          # exact division (tiny)

    # global context stats: exact two-pass (x - mean)^2 form, f32 accumulation;
    # products folded into the reductions (no extra [C, Lp] f32 buffers).
    gmean = jnp.sum(maskf * xb, axis=-1, keepdims=True) * inv_total            # [C, 1]
    gvar = jnp.sum(maskf * jnp.square(xb - gmean), axis=-1, keepdims=True) * inv_total
    gstd = jnp.sqrt(jnp.maximum(gvar, EPS))

    bias_col = _bias_column(gmean, gstd, w1ms_ref, abias_ref)                  # [A, 1]
    scores = _attention_scores(xb, w1x_ref, w2_ref, abias_ref, b2_ref,
                               bias_col, mask, bf16_eup)                       # [C, Lp]

    # masked softmax over time; normalization folded into the pooled sums
    smax = jnp.max(scores, axis=-1, keepdims=True)
    e = jnp.exp(scores - smax)                                                 # [C, Lp]
    inv_se = 1.0 / jnp.sum(e, axis=-1, keepdims=True)                          # exact
    mean = jnp.sum(e * xb, axis=-1, keepdims=True) * inv_se
    var = jnp.sum(e * jnp.square(xb - mean), axis=-1, keepdims=True) * inv_se  # two-pass
    std = jnp.sqrt(jnp.maximum(var, EPS))
    _store_stats(out_ref, mean, std)


# --------------------------------------------------------------------------
# tiled kernel: grid (N, 2, L_tiles); pass 0 = global stats, pass 1 = online softmax
# --------------------------------------------------------------------------
def asp_tiled_kernel(lens_ref, x_ref, w1x_ref, w1ms_ref, abias_ref, w2_ref, b2_ref,
                     out_ref,
                     gsum_scr, gsum2_scr, bias_scr, m_scr, se_scr, sex_scr, sex2_scr,
                     *, bf16_eup):
    b = pl.program_id(0)
    p = pl.program_id(1)
    l = pl.program_id(2)
    n_lt = pl.num_programs(2)

    nvalid = lens_ref[b]
    xb = x_ref[0]                                         # [C, Lt] bf16
    Lt = xb.shape[-1]
    idx = l * Lt + jax.lax.broadcasted_iota(jnp.int32, (1, Lt), 1)
    mask = idx < nvalid
    maskf = mask.astype(jnp.float32)

    # ---------------- pass 0: global weighted mean / std ----------------
    @pl.when(p == 0)
    def _():
        @pl.when(l == 0)
        def _():
            gsum_scr[...] = jnp.zeros_like(gsum_scr)
            gsum2_scr[...] = jnp.zeros_like(gsum2_scr)

        gsum_scr[...] += jnp.sum(maskf * xb, axis=-1, keepdims=True)
        gsum2_scr[...] += jnp.sum(maskf * jnp.square(xb.astype(jnp.float32)),
                                  axis=-1, keepdims=True)

        @pl.when(l == n_lt - 1)
        def _():
            inv_total = 1.0 / nvalid.astype(jnp.float32)
            gmean = gsum_scr[...] * inv_total
            # E[x^2] - mean^2 with f32 accumulation (the resident kernel uses the
            # exact two-pass form).  TODO(synk): Welford merge if channel means are huge.
            gvar = gsum2_scr[...] * inv_total - gmean * gmean
            gstd = jnp.sqrt(jnp.maximum(gvar, EPS))
            bias_scr[...] = _bias_column(gmean, gstd, w1ms_ref, abias_ref)

    # ---------------- pass 1: attention + online-softmax pooling ----------------
    @pl.when(p == 1)
    def _():
        @pl.when(l == 0)
        def _():
            m_scr[...] = jnp.full_like(m_scr, -3.0e38)
            se_scr[...] = jnp.zeros_like(se_scr)
            sex_scr[...] = jnp.zeros_like(sex_scr)
            sex2_scr[...] = jnp.zeros_like(sex2_scr)

        scores = _attention_scores(xb, w1x_ref, w2_ref, abias_ref, b2_ref,
                                   bias_scr[...], mask, bf16_eup)              # [C, Lt]

        m_prev = m_scr[...]
        m_new = jnp.maximum(m_prev, jnp.max(scores, axis=-1, keepdims=True))
        alpha = jnp.exp(m_prev - m_new)                                        # [C, 1]
        e = jnp.exp(scores - m_new)                                            # [C, Lt]
        se_scr[...] = alpha * se_scr[...] + jnp.sum(e, axis=-1, keepdims=True)
        sex_scr[...] = alpha * sex_scr[...] + jnp.sum(e * xb, axis=-1, keepdims=True)
        sex2_scr[...] = alpha * sex2_scr[...] + jnp.sum(
            e * jnp.square(xb.astype(jnp.float32)), axis=-1, keepdims=True)
        m_scr[...] = m_new

        @pl.when(l == n_lt - 1)
        def _():
            inv = 1.0 / se_scr[...]                                            # exact
            mean = sex_scr[...] * inv
            var = sex2_scr[...] * inv - mean * mean
            std = jnp.sqrt(jnp.maximum(var, EPS))
            _store_stats(out_ref, mean, std)


# --------------------------------------------------------------------------
# pallas_call builders
# --------------------------------------------------------------------------
def _weight_specs(shapes, index_map, single_buffer):
    if single_buffer:
        # constant index_map -> fetched once; single buffer reclaims the 2nd copy
        return [pl.BlockSpec(s, index_map, pipeline_mode=pl.Buffered(1)) for s in shapes]
    return [pl.BlockSpec(s, index_map) for s in shapes]


def _call_resident(nvalid, xb, w1x, w1ms, abias, w2, b2, *,
                   bf16_eup, vmem_limit, single_buffer):
    N, C, Lp = xb.shape
    A = w1x.shape[0]
    wshapes = [(A, C), (A, 2 * C), (A, 3), (C, A), (C, 1)]
    wspecs = _weight_specs(wshapes, lambda b, lens: (0, 0), single_buffer)
    return pl.pallas_call(
        functools.partial(asp_resident_kernel, bf16_eup=bf16_eup),
        out_shape=jax.ShapeDtypeStruct((N, 2, C), jnp.float32),
        grid_spec=pltpu.PrefetchScalarGridSpec(
            num_scalar_prefetch=1,
            grid=(N,),
            in_specs=[pl.BlockSpec((1, C, Lp), lambda b, lens: (b, 0, 0))] + wspecs,
            out_specs=pl.BlockSpec((1, 2, C), lambda b, lens: (b, 0, 0)),
        ),
        compiler_params=pltpu.CompilerParams(
            dimension_semantics=("parallel",),
            vmem_limit_bytes=vmem_limit),
    )(nvalid, xb, w1x, w1ms, abias, w2, b2)


def _call_tiled(nvalid, xb, w1x, w1ms, abias, w2, b2, *,
                tile_l, bf16_eup, vmem_limit, single_buffer):
    N, C, Lp = xb.shape
    A = w1x.shape[0]
    n_lt = Lp // tile_l
    wshapes = [(A, C), (A, 2 * C), (A, 3), (C, A), (C, 1)]
    wspecs = _weight_specs(wshapes, lambda b, p, l, lens: (0, 0), single_buffer)
    return pl.pallas_call(
        functools.partial(asp_tiled_kernel, bf16_eup=bf16_eup),
        out_shape=jax.ShapeDtypeStruct((N, 2, C), jnp.float32),
        grid_spec=pltpu.PrefetchScalarGridSpec(
            num_scalar_prefetch=1,
            grid=(N, 2, n_lt),
            in_specs=[pl.BlockSpec((1, C, tile_l),
                                   lambda b, p, l, lens: (b, 0, l))] + wspecs,
            out_specs=pl.BlockSpec((1, 2, C), lambda b, p, l, lens: (b, 0, 0)),
            scratch_shapes=[pltpu.VMEM((C, 1), jnp.float32),   # gsum
                            pltpu.VMEM((C, 1), jnp.float32),   # gsum2
                            pltpu.VMEM((A, 1), jnp.float32),   # bias column
                            pltpu.VMEM((C, 1), jnp.float32),   # running max
                            pltpu.VMEM((C, 1), jnp.float32),   # sum(e)
                            pltpu.VMEM((C, 1), jnp.float32),   # sum(e*x)
                            pltpu.VMEM((C, 1), jnp.float32)],  # sum(e*x^2)
        ),
        compiler_params=pltpu.CompilerParams(
            dimension_semantics=("parallel", "arbitrary", "arbitrary"),
            vmem_limit_bytes=vmem_limit),
    )(nvalid, xb, w1x, w1ms, abias, w2, b2)


# --------------------------------------------------------------------------
# public wrapper
# --------------------------------------------------------------------------
def attentive_statistics_pooling(x, params, lengths=None, *, force_tiled=False, tile_l=None):
    """x: [N, C, L].  Returns [N, 2C, 1] float32 (concat of attentive mean and std)."""
    N, C, L = x.shape
    A = params["w1"].shape[0]

    if lengths is None:
        lengths = jnp.ones((N,), jnp.float32)
    # frame l valid iff l < lengths[n] * L; clamp >= 1 so an empty sequence
    # degrades to "first frame only" instead of producing NaNs.
    nvalid = jnp.clip(jnp.ceil(lengths * L), 1, L).astype(jnp.int32)           # [N]

    # parameter splitting / eval-mode BN folding (once, outside the kernel)
    w1 = params["w1"]                                       # [A, 3C]
    w1x = w1[:, :C].astype(jnp.bfloat16)                    # acts on x          -> MXU bf16
    w1ms = w1[:, C:].astype(jnp.float32)                    # acts on [mean;std] -> VPU f32
    bn_scale = params["bn_g"] * jax.lax.rsqrt(params["bn_rv"] + BN_EPS)
    bn_shift = params["bn_b"] - params["bn_rm"] * bn_scale
    abias = jnp.stack([params["b1"], bn_scale, bn_shift], axis=1).astype(jnp.float32)
    w2 = params["w2"].astype(jnp.bfloat16)                  # [C, A]
    b2 = params["b2"].reshape(C, 1).astype(jnp.float32)

    bf16_eup = _bf16_eup_supported()
    budget = _vmem_budget_bytes()
    wbytes = A * C * 2 + A * 2 * C * 4 + A * 3 * 4 + C * A * 2 + C * 4

    def est(lt):   # per-step VMEM working set for an x tile of length lt
        return (2 * C * lt * 2          # double-buffered bf16 x tile
                + 3 * C * lt * 4        # scores / exp() f32 working set
                + 2 * A * lt * 4        # h (f32 + bf16 copy)
                + wbytes                # weights, single-buffered
                + (2 << 20))            # fixed overhead

    Lp_full = -(-L // 128) * 128
    tiled = force_tiled or est(Lp_full) > budget
    if tiled:
        if tile_l is not None:
            Lt = max(128, -(-tile_l // 128) * 128)
        else:
            Lt = 128
            while Lt * 2 <= Lp_full and est(Lt * 2) <= budget:
                Lt *= 2
        Lt = min(Lt, Lp_full)
        Lp = -(-L // Lt) * Lt
    else:
        Lt = Lp = Lp_full

    xb = x.astype(jnp.bfloat16)                             # stream x at half the HBM bytes
    if Lp != L:
        xb = jnp.pad(xb, ((0, 0), (0, 0), (0, Lp - L)))     # padded frames are masked out

    vmem_limit = int(max(32 << 20, min(budget, est(Lt) + (8 << 20))))

    common = dict(bf16_eup=bf16_eup, vmem_limit=vmem_limit)
    call = functools.partial(_call_tiled, tile_l=Lt) if tiled else _call_resident
    try:
        out = call(nvalid, xb, w1x, w1ms, abias, w2, b2, single_buffer=True, **common)
    except Exception:
        # pl.Buffered(1) single-buffering not supported on this JAX/libtpu combo;
        # fall back to default double-buffering of the (small) weight operands.
        out = call(nvalid, xb, w1x, w1ms, abias, w2, b2, single_buffer=False, **common)

    # lane-dense [N, 2, C] -> [N, 2C, 1] (first C channels = mean, next C = std)
    return out.reshape(N, 2 * C, 1)


# --------------------------------------------------------------------------
# pure-JAX reference + synthetic params
# --------------------------------------------------------------------------
def asp_reference(x, params, lengths=None):
    """Pure-JAX reference mirroring the PyTorch module (eval-mode BatchNorm)."""
    N, C, L = x.shape
    if lengths is None:
        lengths = jnp.ones((N,), jnp.float32)
    pos = jnp.arange(L, dtype=jnp.float32)[None, :]
    mask = (pos < lengths[:, None] * L).astype(jnp.float32)[:, None, :]     # [N,1,L]
    total = jnp.sum(mask, axis=2, keepdims=True)

    def stats(x, m):
        mean = jnp.sum(m * x, axis=2)
        var = jnp.sum(m * (x - mean[:, :, None]) ** 2, axis=2)
        return mean, jnp.sqrt(jnp.maximum(var, EPS))

    gmean, gstd = stats(x, mask / total)
    attn_in = jnp.concatenate(
        [x,
         jnp.repeat(gmean[:, :, None], L, axis=2),
         jnp.repeat(gstd[:, :, None], L, axis=2)], axis=1)                   # [N,3C,L]
    h = jnp.einsum('ac,ncl->nal', params["w1"], attn_in) + params["b1"][None, :, None]
    h = jnp.maximum(h, 0.0)
    h = ((h - params["bn_rm"][None, :, None])
         * jax.lax.rsqrt(params["bn_rv"][None, :, None] + BN_EPS)
         * params["bn_g"][None, :, None] + params["bn_b"][None, :, None])
    h = jnp.tanh(h)
    scores = jnp.einsum('ca,nal->ncl', params["w2"], h) + params["b2"][None, :, None]
    scores = jnp.where(mask > 0, scores, -jnp.inf)
    attn = jax.nn.softmax(scores, axis=2)
    mean, std = stats(x, attn)
    return jnp.concatenate([mean, std], axis=1)[:, :, None]


def init_params(key, channels, attention_channels):
    """Deterministic synthetic parameters matching the module's shapes."""
    C, A = channels, attention_channels
    k1, k2, k3, k4 = jax.random.split(key, 4)
    return {
        # TDNNBlock(3C -> A, kernel_size=1): conv weight [A, 3C(, 1)], bias [A]
        "w1": 0.1 * jax.random.normal(k1, (A, 3 * C), jnp.float32),
        "b1": 0.1 * jax.random.normal(k2, (A,), jnp.float32),
        # BatchNorm1d(A): default init (affine=1/0, running stats 0/1)
        "bn_g": jnp.ones((A,), jnp.float32),
        "bn_b": jnp.zeros((A,), jnp.float32),
        "bn_rm": jnp.zeros((A,), jnp.float32),
        "bn_rv": jnp.ones((A,), jnp.float32),
        # Conv1d(A -> C, kernel_size=1): weight [C, A(, 1)], bias [C]
        "w2": 0.1 * jax.random.normal(k3, (C, A), jnp.float32),
        "b2": 0.1 * jax.random.normal(k4, (C,), jnp.float32),
    }


if __name__ == "__main__":
    key = jax.random.PRNGKey(0)
    kx, kp, kx2 = jax.random.split(key, 3)

    # Small config: resident path (single x tile kept in VMEM).
    N, C, L, A = 2, 4, 16, 8
    x = jax.random.normal(kx, (N, C, L), jnp.float32)
    params = init_params(kp, C, A)
    lengths = jnp.array([1.0, 0.6], jnp.float32)        # exercises the masking path

    pooled = jax.block_until_ready(attentive_statistics_pooling(x, params, lengths=lengths))
    assert pooled.shape == (N, 2 * C, 1)
    assert bool(jnp.all(jnp.isfinite(pooled)))
    ref = asp_reference(x, params, lengths=lengths)
    err = float(jnp.max(jnp.abs(pooled - ref)))
    assert err < 5e-2, f"resident path: max abs err {err}"   # bf16 x stream / bf16 MXU

    # Longer sequence forced through the L-tiled online-softmax path
    # (2 time tiles of 128 -> exercises the cross-tile softmax merge and a
    # fully-masked trailing tile for the short utterance).
    L2 = 200
    x2 = jax.random.normal(kx2, (N, C, L2), jnp.float32)
    lengths2 = jnp.array([1.0, 0.55], jnp.float32)
    pooled2 = jax.block_until_ready(
        attentive_statistics_pooling(x2, params, lengths=lengths2,
                                     force_tiled=True, tile_l=128))
    assert pooled2.shape == (N, 2 * C, 1)
    assert bool(jnp.all(jnp.isfinite(pooled2)))
    ref2 = asp_reference(x2, params, lengths=lengths2)
    err2 = float(jnp.max(jnp.abs(pooled2 - ref2)))
    assert err2 < 5e-2, f"tiled path: max abs err {err2}"

    print("KERNEL_OK")
</pallas_src>

<mosaic_0001>
module attributes {stable_mosaic.version = 11 : i64} {
  func.func @asp_resident_kernel(%arg0: i32, %arg1: memref<2xi32, #tpu.memory_space<smem>>, %arg2: memref<1x4x128xbf16, #tpu.memory_space<vmem>>, %arg3: memref<8x4xbf16, #tpu.memory_space<vmem>>, %arg4: memref<8x8xf32, #tpu.memory_space<vmem>>, %arg5: memref<8x3xf32, #tpu.memory_space<vmem>>, %arg6: memref<4x8xbf16, #tpu.memory_space<vmem>>, %arg7: memref<4x1xf32, #tpu.memory_space<vmem>>, %arg8: memref<1x2x4xf32, #tpu.memory_space<vmem>>) attributes {dimension_semantics = [#tpu.dimension_semantics<parallel>], iteration_bounds = array<i64: 2>, scalar_prefetch = 1 : i64, scratch_operands = 0 : i64, tpu.core_type = #tpu.core_type<tc>, window_params = [{transform_indices = @transform_0, window_bounds = array<i64: 1, 4, 128>}, {pipeline_mode = #tpu.pipeline_mode<synchronous>, transform_indices = @transform_1, window_bounds = array<i64: 8, 4>}, {pipeline_mode = #tpu.pipeline_mode<synchronous>, transform_indices = @transform_2, window_bounds = array<i64: 8, 8>}, {pipeline_mode = #tpu.pipeline_mode<synchronous>, transform_indices = @transform_3, window_bounds = array<i64: 8, 3>}, {pipeline_mode = #tpu.pipeline_mode<synchronous>, transform_indices = @transform_4, window_bounds = array<i64: 4, 8>}, {pipeline_mode = #tpu.pipeline_mode<synchronous>, transform_indices = @transform_5, window_bounds = array<i64: 4, 1>}, {transform_indices = @transform_6, window_bounds = array<i64: 1, 2, 4>}]} {
    %0 = arith.index_cast %arg0 : i32 to index
    %1 = memref.load %arg1[%0] : memref<2xi32, #tpu.memory_space<smem>>
    %c0 = arith.constant 0 : index
    %c0_0 = arith.constant 0 : index
    %c0_1 = arith.constant 0 : index
    %2 = vector.load %arg2[%c0, %c0_0, %c0_1] : memref<1x4x128xbf16, #tpu.memory_space<vmem>>, vector<1x4x128xbf16>
    %3 = vector.shape_cast %2 : vector<1x4x128xbf16> to vector<4x128xbf16>
    %4 = tpu.iota {dimensions = array<i32: 1>} : vector<1x128xi32>
    %5 = vector.broadcast %1 : i32 to vector<1x128xi32>
    %6 = arith.cmpi slt, %4, %5 : vector<1x128xi32>
    %7 = arith.extui %6 : vector<1x128xi1> to vector<1x128xi32>
    %8 = arith.sitofp %7 : vector<1x128xi32> to vector<1x128xf32>
    %9 = arith.sitofp %1 : i32 to f32
    %cst = arith.constant 1.000000e+00 : f32
    %10 = arith.divf %cst, %9 : f32
    %11 = arith.extf %3 : vector<4x128xbf16> to vector<4x128xf32>
    %12 = vector.broadcast %8 : vector<1x128xf32> to vector<4x128xf32>
    %13 = arith.mulf %12, %11 : vector<4x128xf32>
    %cst_2 = arith.constant dense<0.000000e+00> : vector<4xf32>
    %14 = vector.multi_reduction <add>, %13, %cst_2 [1] : vector<4x128xf32> to vector<4xf32>
    %15 = vector.shape_cast %14 : vector<4xf32> to vector<4x1xf32>
    %16 = vector.broadcast %10 : f32 to vector<4x1xf32>
    %17 = arith.mulf %15, %16 : vector<4x1xf32>
    %18 = arith.extf %3 : vector<4x128xbf16> to vector<4x128xf32>
    %19 = vector.broadcast %17 : vector<4x1xf32> to vector<4x128xf32>
    %20 = arith.subf %18, %19 : vector<4x128xf32>
    %21 = arith.mulf %20, %20 : vector<4x128xf32>
    %22 = vector.broadcast %8 : vector<1x128xf32> to vector<4x128xf32>
    %23 = arith.mulf %22, %21 : vector<4x128xf32>
    %cst_3 = arith.constant dense<0.000000e+00> : vector<4xf32>
    %24 = vector.multi_reduction <add>, %23, %cst_3 [1] : vector<4x128xf32> to vector<4xf32>
    %25 = vector.shape_cast %24 : vector<4xf32> to vector<4x1xf32>
    %26 = vector.broadcast %10 : f32 to vector<4x1xf32>
    %27 = arith.mulf %25, %26 : vector<4x1xf32>
    %cst_4 = arith.constant 9.99999996E-13 : f32
    %28 = vector.broadcast %cst_4 : f32 to vector<4x1xf32>
    %29 = arith.maximumf %27, %28 : vector<4x1xf32>
    %30 = math.sqrt %29 : vector<4x1xf32>
    %31 = tpu.concatenate %17, %30 in 0 : vector<4x1xf32>, vector<4x1xf32> -> vector<8x1xf32>
    %32 = tpu.transpose %31, [1, 0] : vector<8x1xf32> -> vector<1x8xf32>
    %c0_5 = arith.constant 0 : index
    %c0_6 = arith.constant 0 : index
    %33 = vector.load %arg4[%c0_5, %c0_6] : memref<8x8xf32, #tpu.memory_space<vmem>>, vector<8x8xf32>
    %34 = vector.broadcast %32 : vector<1x8xf32> to vector<8x8xf32>
    %35 = arith.mulf %33, %34 : vector<8x8xf32>
    %cst_7 = arith.constant dense<0.000000e+00> : vector<8xf32>
    %36 = vector.multi_reduction <add>, %35, %cst_7 [1] : vector<8x8xf32> to vector<8xf32>
    %37 = vector.shape_cast %36 : vector<8xf32> to vector<8x1xf32>
    %c0_8 = arith.constant 0 : index
    %c0_9 = arith.constant 0 : index
    %38 = vector.load %arg5[%c0_8, %c0_9] : memref<8x3xf32, #tpu.memory_space<vmem>>, vector<8x1xf32>
    %39 = arith.addf %37, %38 : vector<8x1xf32>
    %c0_10 = arith.constant 0 : index
    %c0_11 = arith.constant 0 : index
    %40 = vector.load %arg3[%c0_10, %c0_11] : memref<8x4xbf16, #tpu.memory_space<vmem>>, vector<8x4xbf16>
    %cst_12 = arith.constant dense<0.000000e+00> : vector<8x128xf32>
    %41 = tpu.matmul %40, %3, %cst_12 {dimension_numbers = #tpu.dot_dimension_numbers<[1], [0], [0], [1], [0, 0, 1, 1], [], []>} : vector<8x4xbf16>, vector<4x128xbf16>, vector<8x128xf32> -> vector<8x128xf32>
    %42 = vector.broadcast %39 : vector<8x1xf32> to vector<8x128xf32>
    %43 = arith.addf %41, %42 : vector<8x128xf32>
    %cst_13 = arith.constant 0.000000e+00 : f32
    %44 = vector.broadcast %cst_13 : f32 to vector<8x128xf32>
    %45 = arith.maximumf %43, %44 : vector<8x128xf32>
    %c0_14 = arith.constant 0 : index
    %c1 = arith.constant 1 : index
    %46 = vector.load %arg5[%c0_14, %c1] : memref<8x3xf32, #tpu.memory_space<vmem>>, vector<8x1xf32>
    %47 = vector.broadcast %46 : vector<8x1xf32> to vector<8x128xf32>
    %48 = arith.mulf %45, %47 : vector<8x128xf32>
    %c0_15 = arith.constant 0 : index
    %c2 = arith.constant 2 : index
    %49 = vector.load %arg5[%c0_15, %c2] : memref<8x3xf32, #tpu.memory_space<vmem>>, vector<8x1xf32>
    %50 = vector.broadcast %49 : vector<8x1xf32> to vector<8x128xf32>
    %51 = arith.addf %48, %50 : vector<8x128xf32>
    %52 = arith.truncf %51 : vector<8x128xf32> to vector<8x128xbf16>
    %53 = math.tanh %52 : vector<8x128xbf16>
    %c0_16 = arith.constant 0 : index
    %c0_17 = arith.constant 0 : index
    %54 = vector.load %arg6[%c0_16, %c0_17] : memref<4x8xbf16, #tpu.memory_space<vmem>>, vector<4x8xbf16>
    %cst_18 = arith.constant dense<0.000000e+00> : vector<4x128xf32>
    %55 = tpu.matmul %54, %53, %cst_18 {dimension_numbers = #tpu.dot_dimension_numbers<[1], [0], [0], [1], [0, 0, 1, 1], [], []>} : vector<4x8xbf16>, vector<8x128xbf16>, vector<4x128xf32> -> vector<4x128xf32>
    %c0_19 = arith.constant 0 : index
    %c0_20 = arith.constant 0 : index
    %56 = vector.load %arg7[%c0_19, %c0_20] : memref<4x1xf32, #tpu.memory_space<vmem>>, vector<4x1xf32>
    %57 = vector.broadcast %56 : vector<4x1xf32> to vector<4x128xf32>
    %58 = arith.addf %55, %57 : vector<4x128xf32>
    %cst_21 = arith.constant -1.000000e+30 : f32
    %59 = vector.shape_cast %6 : vector<1x128xi1> to vector<1x128xi1>
    %60 = vector.broadcast %59 : vector<1x128xi1> to vector<4x128xi1>
    %61 = vector.broadcast %cst_21 : f32 to vector<4x128xf32>
    %62 = arith.select %60, %58, %61 : vector<4x128xi1>, vector<4x128xf32>
    %cst_22 = arith.constant dense<0xFF800000> : vector<4xf32>
    %63 = vector.multi_reduction <maximumf>, %62, %cst_22 [1] : vector<4x128xf32> to vector<4xf32>
    %64 = vector.shape_cast %63 : vector<4xf32> to vector<4x1xf32>
    %65 = vector.broadcast %64 : vector<4x1xf32> to vector<4x128xf32>
    %66 = arith.subf %62, %65 : vector<4x128xf32>
    %67 = math.exp %66 : vector<4x128xf32>
    %cst_23 = arith.constant dense<0.000000e+00> : vector<4xf32>
    %68 = vector.multi_reduction <add>, %67, %cst_23 [1] : vector<4x128xf32> to vector<4xf32>
    %69 = vector.shape_cast %68 : vector<4xf32> to vector<4x1xf32>
    %cst_24 = arith.constant 1.000000e+00 : f32
    %70 = vector.broadcast %cst_24 : f32 to vector<4x1xf32>
    %71 = arith.divf %70, %69 : vector<4x1xf32>
    %72 = arith.extf %3 : vector<4x128xbf16> to vector<4x128xf32>
    %73 = arith.mulf %67, %72 : vector<4x128xf32>
    %cst_25 = arith.constant dense<0.000000e+00> : vector<4xf32>
    %74 = vector.multi_reduction <add>, %73, %cst_25 [1] : vector<4x128xf32> to vector<4xf32>
    %75 = vector.shape_cast %74 : vector<4xf32> to vector<4x1xf32>
    %76 = arith.mulf %75, %71 : vector<4x1xf32>
    %77 = arith.extf %3 : vector<4x128xbf16> to vector<4x128xf32>
    %78 = vector.broadcast %76 : vector<4x1xf32> to vector<4x128xf32>
    %79 = arith.subf %77, %78 : vector<4x128xf32>
    %80 = arith.mulf %79, %79 : vector<4x128xf32>
    %81 = arith.mulf %67, %80 : vector<4x128xf32>
    %cst_26 = arith.constant dense<0.000000e+00> : vector<4xf32>
    %82 = vector.multi_reduction <add>, %81, %cst_26 [1] : vector<4x128xf32> to vector<4xf32>
    %83 = vector.shape_cast %82 : vector<4xf32> to vector<4x1xf32>
    %84 = arith.mulf %83, %71 : vector<4x1xf32>
    %cst_27 = arith.constant 9.99999996E-13 : f32
    %85 = vector.broadcast %cst_27 : f32 to vector<4x1xf32>
    %86 = arith.maximumf %84, %85 : vector<4x1xf32>
    %87 = math.sqrt %86 : vector<4x1xf32>
    %88 = tpu.concatenate %76, %87 in 1 : vector<4x1xf32>, vector<4x1xf32> -> vector<4x2xf32>
    %89 = tpu.transpose %88, [1, 0] : vector<4x2xf32> -> vector<2x4xf32>
    %c0_28 = arith.constant 0 : index
    %c0_29 = arith.constant 0 : index
    %c0_30 = arith.constant 0 : index
    %90 = vector.load %arg8[%c0_28, %c0_29, %c0_30] : memref<1x2x4xf32, #tpu.memory_space<vmem>>, vector<1x2x4xf32>
    %91 = vector.shape_cast %90 : vector<1x2x4xf32> to vector<2x4xf32>
    %92 = vector.shape_cast %89 : vector<2x4xf32> to vector<1x2x4xf32>
    tpu.vector_store %arg8[%c0_28, %c0_29, %c0_30], %92 {strides = array<i32>} : memref<1x2x4xf32, #tpu.memory_space<vmem>>, vector<1x2x4xf32>,
    return
  }
  func.func @transform_0(%arg0: i32, %arg1: memref<2xi32, #tpu.memory_space<smem>>) -> (i32, i32, i32) {
    %c0_i32 = arith.constant 0 : i32
    %c0_i32_0 = arith.constant 0 : i32
    %c0_i32_1 = arith.constant 0 : i32
    return %arg0, %c0_i32, %c0_i32_0 : i32, i32, i32
  }
  func.func @transform_1(%arg0: i32, %arg1: memref<2xi32, #tpu.memory_space<smem>>) -> (i32, i32) {
    %c0_i32 = arith.constant 0 : i32
    %c0_i32_0 = arith.constant 0 : i32
    %c0_i32_1 = arith.constant 0 : i32
    return %c0_i32, %c0_i32_0 : i32, i32
  }
  func.func @transform_2(%arg0: i32, %arg1: memref<2xi32, #tpu.memory_space<smem>>) -> (i32, i32) {
    %c0_i32 = arith.constant 0 : i32
    %c0_i32_0 = arith.constant 0 : i32
    %c0_i32_1 = arith.constant 0 : i32
    return %c0_i32, %c0_i32_0 : i32, i32
  }
  func.func @transform_3(%arg0: i32, %arg1: memref<2xi32, #tpu.memory_space<smem>>) -> (i32, i32) {
    %c0_i32 = arith.constant 0 : i32
    %c0_i32_0 = arith.constant 0 : i32
    %c0_i32_1 = arith.constant 0 : i32
    return %c0_i32, %c0_i32_0 : i32, i32
  }
  func.func @transform_4(%arg0: i32, %arg1: memref<2xi32, #tpu.memory_space<smem>>) -> (i32, i32) {
    %c0_i32 = arith.constant 0 : i32
    %c0_i32_0 = arith.constant 0 : i32
    %c0_i32_1 = arith.constant 0 : i32
    return %c0_i32, %c0_i32_0 : i32, i32
  }
  func.func @transform_5(%arg0: i32, %arg1: memref<2xi32, #tpu.memory_space<smem>>) -> (i32, i32) {
    %c0_i32 = arith.constant 0 : i32
    %c0_i32_0 = arith.constant 0 : i32
    %c0_i32_1 = arith.constant 0 : i32
    return %c0_i32, %c0_i32_0 : i32, i32
  }
  func.func @transform_6(%arg0: i32, %arg1: memref<2xi32, #tpu.memory_space<smem>>) -> (i32, i32, i32) {
    %c0_i32 = arith.constant 0 : i32
    %c0_i32_0 = arith.constant 0 : i32
    %c0_i32_1 = arith.constant 0 : i32
    return %arg0, %c0_i32, %c0_i32_0 : i32, i32, i32
  }
}

module attributes {stable_mosaic.version = 11 : i64} {
  func.func @asp_resident_kernel(%arg0: i32, %arg1: memref<2xi32, #tpu.memory_space<smem>>, %arg2: memref<1x4x128xbf16, #tpu.memory_space<vmem>>, %arg3: memref<8x4xbf16, #tpu.memory_space<vmem>>, %arg4: memref<8x8xf32, #tpu.memory_space<vmem>>, %arg5: memref<8x3xf32, #tpu.memory_space<vmem>>, %arg6: memref<4x8xbf16, #tpu.memory_space<vmem>>, %arg7: memref<4x1xf32, #tpu.memory_space<vmem>>, %arg8: memref<1x2x4xf32, #tpu.memory_space<vmem>>) attributes {dimension_semantics = [#tpu.dimension_semantics<parallel>], iteration_bounds = array<i64: 2>, scalar_prefetch = 1 : i64, scratch_operands = 0 : i64, tpu.core_type = #tpu.core_type<tc>, window_params = [{transform_indices = @transform_0, window_bounds = array<i64: 1, 4, 128>}, {pipeline_mode = #tpu.pipeline_mode<synchronous>, transform_indices = @transform_1, window_bounds = array<i64: 8, 4>}, {pipeline_mode = #tpu.pipeline_mode<synchronous>, transform_indices = @transform_2, window_bounds = array<i64: 8, 8>}, {pipeline_mode = #tpu.pipeline_mode<synchronous>, transform_indices = @transform_3, window_bounds = array<i64: 8, 3>}, {pipeline_mode = #tpu.pipeline_mode<synchronous>, transform_indices = @transform_4, window_bounds = array<i64: 4, 8>}, {pipeline_mode = #tpu.pipeline_mode<synchronous>, transform_indices = @transform_5, window_bounds = array<i64: 4, 1>}, {transform_indices = @transform_6, window_bounds = array<i64: 1, 2, 4>}]} {
    %0 = arith.index_cast %arg0 : i32 to index
    %1 = memref.load %arg1[%0] : memref<2xi32, #tpu.memory_space<smem>>
    %c0 = arith.constant 0 : index
    %c0_0 = arith.constant 0 : index
    %c0_1 = arith.constant 0 : index
    %2 = vector.load %arg2[%c0, %c0_0, %c0_1] : memref<1x4x128xbf16, #tpu.memory_space<vmem>>, vector<1x4x128xbf16>
    %3 = vector.shape_cast %2 : vector<1x4x128xbf16> to vector<4x128xbf16>
    %4 = tpu.iota {dimensions = array<i32: 1>} : vector<1x128xi32>
    %5 = vector.broadcast %1 : i32 to vector<1x128xi32>
    %6 = arith.cmpi slt, %4, %5 : vector<1x128xi32>
    %7 = arith.extui %6 : vector<1x128xi1> to vector<1x128xi32>
    %8 = arith.sitofp %7 : vector<1x128xi32> to vector<1x128xf32>
    %9 = arith.sitofp %1 : i32 to f32
    %cst = arith.constant 1.000000e+00 : f32
    %10 = arith.divf %cst, %9 : f32
    %11 = arith.extf %3 : vector<4x128xbf16> to vector<4x128xf32>
    %12 = vector.broadcast %8 : vector<1x128xf32> to vector<4x128xf32>
    %13 = arith.mulf %12, %11 : vector<4x128xf32>
    %cst_2 = arith.constant dense<0.000000e+00> : vector<4xf32>
    %14 = vector.multi_reduction <add>, %13, %cst_2 [1] : vector<4x128xf32> to vector<4xf32>
    %15 = vector.shape_cast %14 : vector<4xf32> to vector<4x1xf32>
    %16 = vector.broadcast %10 : f32 to vector<4x1xf32>
    %17 = arith.mulf %15, %16 : vector<4x1xf32>
    %18 = arith.extf %3 : vector<4x128xbf16> to vector<4x128xf32>
    %19 = vector.broadcast %17 : vector<4x1xf32> to vector<4x128xf32>
    %20 = arith.subf %18, %19 : vector<4x128xf32>
    %21 = arith.mulf %20, %20 : vector<4x128xf32>
    %22 = vector.broadcast %8 : vector<1x128xf32> to vector<4x128xf32>
    %23 = arith.mulf %22, %21 : vector<4x128xf32>
    %cst_3 = arith.constant dense<0.000000e+00> : vector<4xf32>
    %24 = vector.multi_reduction <add>, %23, %cst_3 [1] : vector<4x128xf32> to vector<4xf32>
    %25 = vector.shape_cast %24 : vector<4xf32> to vector<4x1xf32>
    %26 = vector.broadcast %10 : f32 to vector<4x1xf32>
    %27 = arith.mulf %25, %26 : vector<4x1xf32>
    %cst_4 = arith.constant 9.99999996E-13 : f32
    %28 = vector.broadcast %cst_4 : f32 to vector<4x1xf32>
    %29 = arith.maximumf %27, %28 : vector<4x1xf32>
    %30 = math.sqrt %29 : vector<4x1xf32>
    %31 = tpu.concatenate %17, %30 in 0 : vector<4x1xf32>, vector<4x1xf32> -> vector<8x1xf32>
    %32 = tpu.transpose %31, [1, 0] : vector<8x1xf32> -> vector<1x8xf32>
    %c0_5 = arith.constant 0 : index
    %c0_6 = arith.constant 0 : index
    %33 = vector.load %arg4[%c0_5, %c0_6] : memref<8x8xf32, #tpu.memory_space<vmem>>, vector<8x8xf32>
    %34 = vector.broadcast %32 : vector<1x8xf32> to vector<8x8xf32>
    %35 = arith.mulf %33, %34 : vector<8x8xf32>
    %cst_7 = arith.constant dense<0.000000e+00> : vector<8xf32>
    %36 = vector.multi_reduction <add>, %35, %cst_7 [1] : vector<8x8xf32> to vector<8xf32>
    %37 = vector.shape_cast %36 : vector<8xf32> to vector<8x1xf32>
    %c0_8 = arith.constant 0 : index
    %c0_9 = arith.constant 0 : index
    %38 = vector.load %arg5[%c0_8, %c0_9] : memref<8x3xf32, #tpu.memory_space<vmem>>, vector<8x1xf32>
    %39 = arith.addf %37, %38 : vector<8x1xf32>
    %c0_10 = arith.constant 0 : index
    %c0_11 = arith.constant 0 : index
    %40 = vector.load %arg3[%c0_10, %c0_11] : memref<8x4xbf16, #tpu.memory_space<vmem>>, vector<8x4xbf16>
    %cst_12 = arith.constant dense<0.000000e+00> : vector<8x128xf32>
    %41 = tpu.matmul %40, %3, %cst_12 {dimension_numbers = #tpu.dot_dimension_numbers<[1], [0], [0], [1], [0, 0, 1, 1], [], []>} : vector<8x4xbf16>, vector<4x128xbf16>, vector<8x128xf32> -> vector<8x128xf32>
    %42 = vector.broadcast %39 : vector<8x1xf32> to vector<8x128xf32>
    %43 = arith.addf %41, %42 : vector<8x128xf32>
    %cst_13 = arith.constant 0.000000e+00 : f32
    %44 = vector.broadcast %cst_13 : f32 to vector<8x128xf32>
    %45 = arith.maximumf %43, %44 : vector<8x128xf32>
    %c0_14 = arith.constant 0 : index
    %c1 = arith.constant 1 : index
    %46 = vector.load %arg5[%c0_14, %c1] : memref<8x3xf32, #tpu.memory_space<vmem>>, vector<8x1xf32>
    %47 = vector.broadcast %46 : vector<8x1xf32> to vector<8x128xf32>
    %48 = arith.mulf %45, %47 : vector<8x128xf32>
    %c0_15 = arith.constant 0 : index
    %c2 = arith.constant 2 : index
    %49 = vector.load %arg5[%c0_15, %c2] : memref<8x3xf32, #tpu.memory_space<vmem>>, vector<8x1xf32>
    %50 = vector.broadcast %49 : vector<8x1xf32> to vector<8x128xf32>
    %51 = arith.addf %48, %50 : vector<8x128xf32>
    %52 = arith.truncf %51 : vector<8x128xf32> to vector<8x128xbf16>
    %53 = math.tanh %52 : vector<8x128xbf16>
    %c0_16 = arith.constant 0 : index
    %c0_17 = arith.constant 0 : index
    %54 = vector.load %arg6[%c0_16, %c0_17] : memref<4x8xbf16, #tpu.memory_space<vmem>>, vector<4x8xbf16>
    %cst_18 = arith.constant dense<0.000000e+00> : vector<4x128xf32>
    %55 = tpu.matmul %54, %53, %cst_18 {dimension_numbers = #tpu.dot_dimension_numbers<[1], [0], [0], [1], [0, 0, 1, 1], [], []>} : vector<4x8xbf16>, vector<8x128xbf16>, vector<4x128xf32> -> vector<4x128xf32>
    %c0_19 = arith.constant 0 : index
    %c0_20 = arith.constant 0 : index
    %56 = vector.load %arg7[%c0_19, %c0_20] : memref<4x1xf32, #tpu.memory_space<vmem>>, vector<4x1xf32>
    %57 = vector.broadcast %56 : vector<4x1xf32> to vector<4x128xf32>
    %58 = arith.addf %55, %57 : vector<4x128xf32>
    %cst_21 = arith.constant -1.000000e+30 : f32
    %59 = vector.shape_cast %6 : vector<1x128xi1> to vector<1x128xi1>
    %60 = vector.broadcast %59 : vector<1x128xi1> to vector<4x128xi1>
    %61 = vector.broadcast %cst_21 : f32 to vector<4x128xf32>
    %62 = arith.select %60, %58, %61 : vector<4x128xi1>, vector<4x128xf32>
    %cst_22 = arith.constant dense<0xFF800000> : vector<4xf32>
    %63 = vector.multi_reduction <maximumf>, %62, %cst_22 [1] : vector<4x128xf32> to vector<4xf32>
    %64 = vector.shape_cast %63 : vector<4xf32> to vector<4x1xf32>
    %65 = vector.broadcast %64 : vector<4x1xf32> to vector<4x128xf32>
    %66 = arith.subf %62, %65 : vector<4x128xf32>
    %67 = math.exp %66 : vector<4x128xf32>
    %cst_23 = arith.constant dense<0.000000e+00> : vector<4xf32>
    %68 = vector.multi_reduction <add>, %67, %cst_23 [1] : vector<4x128xf32> to vector<4xf32>
    %69 = vector.shape_cast %68 : vector<4xf32> to vector<4x1xf32>
    %cst_24 = arith.constant 1.000000e+00 : f32
    %70 = vector.broadcast %cst_24 : f32 to vector<4x1xf32>
    %71 = arith.divf %70, %69 : vector<4x1xf32>
    %72 = arith.extf %3 : vector<4x128xbf16> to vector<4x128xf32>
    %73 = arith.mulf %67, %72 : vector<4x128xf32>
    %cst_25 = arith.constant dense<0.000000e+00> : vector<4xf32>
    %74 = vector.multi_reduction <add>, %73, %cst_25 [1] : vector<4x128xf32> to vector<4xf32>
    %75 = vector.shape_cast %74 : vector<4xf32> to vector<4x1xf32>
    %76 = arith.mulf %75, %71 : vector<4x1xf32>
    %77 = arith.extf %3 : vector<4x128xbf16> to vector<4x128xf32>
    %78 = vector.broadcast %76 : vector<4x1xf32> to vector<4x128xf32>
    %79 = arith.subf %77, %78 : vector<4x128xf32>
    %80 = arith.mulf %79, %79 : vector<4x128xf32>
    %81 = arith.mulf %67, %80 : vector<4x128xf32>
    %cst_26 = arith.constant dense<0.000000e+00> : vector<4xf32>
    %82 = vector.multi_reduction <add>, %81, %cst_26 [1] : vector<4x128xf32> to vector<4xf32>
    %83 = vector.shape_cast %82 : vector<4xf32> to vector<4x1xf32>
    %84 = arith.mulf %83, %71 : vector<4x1xf32>
    %cst_27 = arith.constant 9.99999996E-13 : f32
    %85 = vector.broadcast %cst_27 : f32 to vector<4x1xf32>
    %86 = arith.maximumf %84, %85 : vector<4x1xf32>
    %87 = math.sqrt %86 : vector<4x1xf32>
    %88 = tpu.concatenate %76, %87 in 1 : vector<4x1xf32>, vector<4x1xf32> -> vector<4x2xf32>
    %89 = tpu.transpose %88, [1, 0] : vector<4x2xf32> -> vector<2x4xf32>
    %c0_28 = arith.constant 0 : index
    %c0_29 = arith.constant 0 : index
    %c0_30 = arith.constant 0 : index
    %90 = vector.load %arg8[%c0_28, %c0_29, %c0_30] : memref<1x2x4xf32, #tpu.memory_space<vmem>>, vector<1x2x4xf32>
    %91 = vector.shape_cast %90 : vector<1x2x4xf32> to vector<2x4xf32>
    %92 = vector.shape_cast %89 : vector<2x4xf32> to vector<1x2x4xf32>
    tpu.vector_store %arg8[%c0_28, %c0_29, %c0_30], %92 {strides = array<i32>} : memref<1x2x4xf32, #tpu.memory_space<vmem>>, vector<1x2x4xf32>,
    return
  }
  func.func @transform_0(%arg0: i32, %arg1: memref<2xi32, #tpu.memory_space<smem>>) -> (i32, i32, i32) {
    %c0_i32 = arith.constant 0 : i32
    %c0_i32_0 = arith.constant 0 : i32
    %c0_i32_1 = arith.constant 0 : i32
    return %arg0, %c0_i32, %c0_i32_0 : i32, i32, i32
  }
  func.func @transform_1(%arg0: i32, %arg1: memref<2xi32, #tpu.memory_space<smem>>) -> (i32, i32) {
    %c0_i32 = arith.constant 0 : i32
    %c0_i32_0 = arith.constant 0 : i32
    %c0_i32_1 = arith.constant 0 : i32
    return %c0_i32, %c0_i32_0 : i32, i32
  }
  func.func @transform_2(%arg0: i32, %arg1: memref<2xi32, #tpu.memory_space<smem>>) -> (i32, i32) {
    %c0_i32 = arith.constant 0 : i32
    %c0_i32_0 = arith.constant 0 : i32
    %c0_i32_1 = arith.constant 0 : i32
    return %c0_i32, %c0_i32_0 : i32, i32
  }
  func.func @transform_3(%arg0: i32, %arg1: memref<2xi32, #tpu.memory_space<smem>>) -> (i32, i32) {
    %c0_i32 = arith.constant 0 : i32
    %c0_i32_0 = arith.constant 0 : i32
    %c0_i32_1 = arith.constant 0 : i32
    return %c0_i32, %c0_i32_0 : i32, i32
  }
  func.func @transform_4(%arg0: i32, %arg1: memref<2xi32, #tpu.memory_space<smem>>) -> (i32, i32) {
    %c0_i32 = arith.constant 0 : i32
    %c0_i32_0 = arith.constant 0 : i32
    %c0_i32_1 = arith.constant 0 : i32
    return %c0_i32, %c0_i32_0 : i32, i32
  }
  func.func @transform_5(%arg0: i32, %arg1: memref<2xi32, #tpu.memory_space<smem>>) -> (i32, i32) {
    %c0_i32 = arith.constant 0 : i32
    %c0_i32_0 = arith.constant 0 : i32
    %c0_i32_1 = arith.constant 0 : i32
    return %c0_i32, %c0_i32_0 : i32, i32
  }
  func.func @transform_6(%arg0: i32, %arg1: memref<2xi32, #tpu.memory_space<smem>>) -> (i32, i32, i32) {
    %c0_i32 = arith.constant 0 : i32
    %c0_i32_0 = arith.constant 0 : i32
    %c0_i32_1 = arith.constant 0 : i32
    return %arg0, %c0_i32, %c0_i32_0 : i32, i32, i32
  }
}

</mosaic_0001>

<llo_original>
// kernel: tpu_custom_call.1
$region0: #{tpu_custom_call.1}
  #allocation0 [shape = 'u32[]', space=smem, size = 0x4, offset = 0x4, fixed_abs, tag = 'smem constant byte address 0x4 - core index']
  #allocation1 [shape = 'u32[144,128]{1,0:T(1,128)}', space=vmem, size = 0x12000, scoped, tag = 'internal scratch']
  #allocation2 [shape = 's32[1]{0}', space=sflag, size = 0x4, scoped, tag = 'scoped memory for tpu_custom_call.1']
  #allocation3 [shape = 'u8[512]{0}', space=smem, size = 0x200, scoped, tag = 'prefetched SMEM operand 0']
  %s0 = inlined_call_operand.vmem [shape: s32[2], index: 0, kind: input, shape index: {}]
  %s1 = inlined_call_operand.vmem [shape: bf16[2,4,128], index: 1, kind: input, shape index: {}]
  %s2 = inlined_call_operand.vmem [shape: bf16[8,4], index: 2, kind: input, shape index: {}]
  %s3 = inlined_call_operand.vmem [shape: f32[8,8], index: 3, kind: input, shape index: {}]
  %s4 = inlined_call_operand.vmem [shape: f32[8,3], index: 4, kind: input, shape index: {}]
  %s5 = inlined_call_operand.vmem [shape: bf16[4,8], index: 5, kind: input, shape index: {}]
  %s6 = inlined_call_operand.vmem [shape: f32[4,1], index: 6, kind: input, shape index: {}]
  %s7 = inlined_call_operand.hbm [shape: f32[2,2,4], index: 7, kind: output, shape index: {}]
  %s8 = sld [smem:[#allocation0]]
  $region57: #{tpu_custom_call.1} parent=0
    _
  %s10 = ssub.s32 1, %s8
  %s11 = scalar_select 0, %s10, %s8
  %s12 = sshll.u32 %s0, 4
  %s13 = int_to_ptr.vmem [resolvable:$true] %s12
  %15 = dma.vmem_to_smem %s13, 16, [#allocation3], [#allocation2]
  %16 = dma.done [#allocation2], 16
  %17 = sfence
  $region1: #{tpu_custom_call.1} parent=0
    #allocation4 [shape = 'u8[2048]{0}', space=vmem, size = 0x800, scoped, tag = 'output window, operand 0']
    #allocation5 [shape = 's32[2]{0}', space=sflag, size = 0x8, scoped, tag = 'scoped memory for tpu_custom_call.1']
    %18 = vsyncpa [#allocation5], 0
    %s19 = scalar_lea.sflag [#allocation5], 1
    %20 = vsyncpa %s19, 0
    loop: start=0, step=1, limit=4
    $region2: #{tpu_custom_call.1} parent=1 // loop_pre_header
      _
    $region3: #{tpu_custom_call.1} parent=1 // loop_header
      %s22 = sphi 0, %s26
      %p23 = scmp.ge.s32.totalorder %s22, 4
      %s32 = sphi 0, %s34
      %s35 = sphi 0, %s32
      %s36 = sphi 0, %s35
      %s52 = sphi 0, %s36
      %s56 = sphi 0, %s56
      %s58 = sphi 0, %s56
      %s59 = sphi 0, %s58
      %s73 = sphi 0, %s59
      %s77 = sphi 0, %s77
      %s79 = sphi 0, %s77
      %s80 = sphi 0, %s79
      %s94 = sphi 0, %s80
      %s98 = sphi 0, %s98
      %s100 = sphi 0, %s98
      %s101 = sphi 0, %s100
      %s115 = sphi 0, %s101
      %s119 = sphi 0, %s119
      %s121 = sphi 0, %s119
      %s122 = sphi 0, %s121
      %s136 = sphi 0, %s122
      %s140 = sphi 0, %s140
      %s142 = sphi 0, %s140
      %s143 = sphi 0, %s142
      %s157 = sphi 0, %s143
      %s163 = sphi 0, %s165
      %s166 = sphi 0, %s163
      %s167 = sphi 0, %s166
      %s183 = sphi 0, %s167
    $region4: #{tpu_custom_call.1} parent=1 // loop_header_branch
      %25 = sbr.rel (%p23) target = $region8
    $region5: #{tpu_custom_call.1} parent=1 // loop_body
      %s27 = ssub.s32 %s22, 1
      %s28 = ssub.s32 %s22, 2
      %s29 = sadd.s32 %s22, 1
      %s30 = ssub.s32 %s22, %s29
      %p31 = scmp.eq.s32.totalorder %s30, 0
      %s33 = sadd.s32 %s32, 1
      %s34 = scalar_select %p31, %s32, %s33
      %p37 = pneg %p31
      %p38 = scmp.eq.s32.totalorder %s22, 1
      %p39 = por %p37, %p38
      %p40 = scmp.ne.s32.totalorder %s32, %s35
      %p41 = scmp.eq.s32.totalorder %s22, 0
      %p42 = por %p40, %p41
      %p43 = scmp.ne.s32.totalorder %s32, %s35
      %p44 = scmp.eq.s32.totalorder %s27, 1
      %p45 = por %p43, %p44
      %p46 = scmp.ne.s32.totalorder %s35, %s36
      %p47 = scmp.eq.s32.totalorder %s27, 0
      %p48 = por %p46, %p47
      %p49 = scmp.ne.s32.totalorder %s35, %s36
      %p50 = scmp.eq.s32.totalorder %s28, 1
      %p51 = por %p49, %p50
      %p53 = scmp.ne.s32.totalorder %s36, %s52
      %p54 = scmp.eq.s32.totalorder %s28, 0
      %p55 = por %p53, %p54
      %s57 = sadd.s32 %s56, 1
      %p60 = scmp.eq.s32.totalorder %s22, 1
      %p61 = scmp.ne.s32.totalorder %s56, %s58
      %p62 = scmp.eq.s32.totalorder %s22, 0
      %p63 = por %p61, %p62
      %p64 = scmp.ne.s32.totalorder %s56, %s58
      %p65 = scmp.eq.s32.totalorder %s27, 1
      %p66 = por %p64, %p65
      %p67 = scmp.ne.s32.totalorder %s58, %s59
      %p68 = scmp.eq.s32.totalorder %s27, 0
      %p69 = por %p67, %p68
      %p70 = scmp.ne.s32.totalorder %s58, %s59
      %p71 = scmp.eq.s32.totalorder %s28, 1
      %p72 = por %p70, %p71
      %p74 = scmp.ne.s32.totalorder %s59, %s73
      %p75 = scmp.eq.s32.totalorder %s28, 0
      %p76 = por %p74, %p75
      %s78 = sadd.s32 %s77, 1
      %p81 = scmp.eq.s32.totalorder %s22, 1
      %p82 = scmp.ne.s32.totalorder %s77, %s79
      %p83 = scmp.eq.s32.totalorder %s22, 0
      %p84 = por %p82, %p83
      %p85 = scmp.ne.s32.totalorder %s77, %s79
      %p86 = scmp.eq.s32.totalorder %s27, 1
      %p87 = por %p85, %p86
      %p88 = scmp.ne.s32.totalorder %s79, %s80
      %p89 = scmp.eq.s32.totalorder %s27, 0
      %p90 = por %p88, %p89
      %p91 = scmp.ne.s32.totalorder %s79, %s80
      %p92 = scmp.eq.s32.totalorder %s28, 1
      %p93 = por %p91, %p92
      %p95 = scmp.ne.s32.totalorder %s80, %s94
      %p96 = scmp.eq.s32.totalorder %s28, 0
      %p97 = por %p95, %p96
      %s99 = sadd.s32 %s98, 1
      %p102 = scmp.eq.s32.totalorder %s22, 1
      %p103 = scmp.ne.s32.totalorder %s98, %s100
      %p104 = scmp.eq.s32.totalorder %s22, 0
      %p105 = por %p103, %p104
      %p106 = scmp.ne.s32.totalorder %s98, %s100
      %p107 = scmp.eq.s32.totalorder %s27, 1
      %p108 = por %p106, %p107
      %p109 = scmp.ne.s32.totalorder %s100, %s101
      %p110 = scmp.eq.s32.totalorder %s27, 0
      %p111 = por %p109, %p110
      %p112 = scmp.ne.s32.totalorder %s100, %s101
      %p113 = scmp.eq.s32.totalorder %s28, 1
      %p114 = por %p112, %p113
      %p116 = scmp.ne.s32.totalorder %s101, %s115
      %p117 = scmp.eq.s32.totalorder %s28, 0
      %p118 = por %p116, %p117
      %s120 = sadd.s32 %s119, 1
      %p123 = scmp.eq.s32.totalorder %s22, 1
      %p124 = scmp.ne.s32.totalorder %s119, %s121
      %p125 = scmp.eq.s32.totalorder %s22, 0
      %p126 = por %p124, %p125
      %p127 = scmp.ne.s32.totalorder %s119, %s121
      %p128 = scmp.eq.s32.totalorder %s27, 1
      %p129 = por %p127, %p128
      %p130 = scmp.ne.s32.totalorder %s121, %s122
      %p131 = scmp.eq.s32.totalorder %s27, 0
      %p132 = por %p130, %p131
      %p133 = scmp.ne.s32.totalorder %s121, %s122
      %p134 = scmp.eq.s32.totalorder %s28, 1
      %p135 = por %p133, %p134
      %p137 = scmp.ne.s32.totalorder %s122, %s136
      %p138 = scmp.eq.s32.totalorder %s28, 0
      %p139 = por %p137, %p138
      %s141 = sadd.s32 %s140, 1
      %p144 = scmp.eq.s32.totalorder %s22, 1
      %p145 = scmp.ne.s32.totalorder %s140, %s142
      %p146 = scmp.eq.s32.totalorder %s22, 0
      %p147 = por %p145, %p146
      %p148 = scmp.ne.s32.totalorder %s140, %s142
      %p149 = scmp.eq.s32.totalorder %s27, 1
      %p150 = por %p148, %p149
      %p151 = scmp.ne.s32.totalorder %s142, %s143
      %p152 = scmp.eq.s32.totalorder %s27, 0
      %p153 = por %p151, %p152
      %p154 = scmp.ne.s32.totalorder %s142, %s143
      %p155 = scmp.eq.s32.totalorder %s28, 1
      %p156 = por %p154, %p155
      %p158 = scmp.ne.s32.totalorder %s143, %s157
      %p159 = scmp.eq.s32.totalorder %s28, 0
      %p160 = por %p158, %p159
      %s161 = ssub.s32 %s22, %s29
      %p162 = scmp.eq.s32.totalorder %s161, 0
      %s164 = sadd.s32 %s163, 1
      %s165 = scalar_select %p162, %s163, %s164
      %p168 = pneg %p162
      %p169 = scmp.eq.s32.totalorder %s22, 1
      %p170 = por %p168, %p169
      %p171 = scmp.ne.s32.totalorder %s163, %s166
      %p172 = scmp.eq.s32.totalorder %s22, 0
      %p173 = por %p171, %p172
      %p174 = scmp.ne.s32.totalorder %s163, %s166
      %p175 = scmp.eq.s32.totalorder %s27, 1
      %p176 = por %p174, %p175
      %p177 = scmp.ne.s32.totalorder %s166, %s167
      %p178 = scmp.eq.s32.totalorder %s27, 0
      %p179 = por %p177, %p178
      %p180 = scmp.ne.s32.totalorder %s166, %s167
      %p181 = scmp.eq.s32.totalorder %s28, 1
      %p182 = por %p180, %p181
      %p184 = scmp.ne.s32.totalorder %s167, %s183
      %p185 = scmp.eq.s32.totalorder %s28, 0
      %p186 = por %p184, %p185
      %p187 = scmp.le.s32.totalorder 1, %s22
      %p188 = scmp.lt.s32.totalorder %s22, 3
      %p189 = pnand %p187, %p188
      %p190 = pneg %p189
      // Predicated region
      $region9: #{tpu_custom_call.1} parent=5 // pred_check
        _
      $region10: #{tpu_custom_call.1} parent=5 // pred_check_branch
        %192 = sbr.rel (%p189) target = $region12
      $region11: #{tpu_custom_call.1} parent=5 // pred_region
        %s193 = ssub.s32 %s22, 1
        // Predicated region
        $region13: #{tpu_custom_call.1} parent=11 // pred_check
          %p194 = pneg %p69
        $region14: #{tpu_custom_call.1} parent=11 // pred_check_branch
          %196 = sbr.rel (%p194) target = $region16
        $region15: #{tpu_custom_call.1} parent=11 // pred_region
          _
        $region16: #{tpu_custom_call.1} parent=11 // pred_fallthru
          _
        // Predicated region
        $region17: #{tpu_custom_call.1} parent=11 // pred_check
          %p197 = pneg %p90
        $region18: #{tpu_custom_call.1} parent=11 // pred_check_branch
          %199 = sbr.rel (%p197) target = $region20
        $region19: #{tpu_custom_call.1} parent=11 // pred_region
          _
        $region20: #{tpu_custom_call.1} parent=11 // pred_fallthru
          _
        // Predicated region
        $region21: #{tpu_custom_call.1} parent=11 // pred_check
          %p200 = pneg %p111
        $region22: #{tpu_custom_call.1} parent=11 // pred_check_branch
          %202 = sbr.rel (%p200) target = $region24
        $region23: #{tpu_custom_call.1} parent=11 // pred_region
          _
        $region24: #{tpu_custom_call.1} parent=11 // pred_fallthru
          _
        // Predicated region
        $region25: #{tpu_custom_call.1} parent=11 // pred_check
          %p203 = pneg %p132
        $region26: #{tpu_custom_call.1} parent=11 // pred_check_branch
          %205 = sbr.rel (%p203) target = $region28
        $region27: #{tpu_custom_call.1} parent=11 // pred_region
          _
        $region28: #{tpu_custom_call.1} parent=11 // pred_fallthru
          _
        // Predicated region
        $region29: #{tpu_custom_call.1} parent=11 // pred_check
          %p206 = pneg %p153
        $region30: #{tpu_custom_call.1} parent=11 // pred_check_branch
          %208 = sbr.rel (%p206) target = $region32
        $region31: #{tpu_custom_call.1} parent=11 // pred_region
          _
        $region32: #{tpu_custom_call.1} parent=11 // pred_fallthru
          _
      $region12: #{tpu_custom_call.1} parent=5 // pred_fallthru
        _
      %p209 = scmp.lt.s32.totalorder %s22, 2
      // Predicated region
      $region33: #{tpu_custom_call.1} parent=5 // pred_check
        %p210 = pneg %p209
      $region34: #{tpu_custom_call.1} parent=5 // pred_check_branch
        %212 = sbr.rel (%p210) target = $region36
      $region35: #{tpu_custom_call.1} parent=5 // pred_region
        // Predicated region
        $region37: #{tpu_custom_call.1} parent=35 // pred_check
          %p213 = pneg %p42
        $region38: #{tpu_custom_call.1} parent=35 // pred_check_branch
          %215 = sbr.rel (%p213) target = $region40
        $region39: #{tpu_custom_call.1} parent=35 // pred_region
          %p216 = scmp.lt.s32.totalorder %s22, 1
          %s217 = scalar_select %p216, %s22, 1
          %s218 = smul.addr %s217, 2
          %s219 = scalar_lea.vmem %s1, %s218
        $region40: #{tpu_custom_call.1} parent=35 // pred_fallthru
          _
      $region36: #{tpu_custom_call.1} parent=5 // pred_fallthru
        _
      %p220 = scmp.le.s32.totalorder 1, %s22
      %p221 = scmp.lt.s32.totalorder %s22, 3
      %p222 = pnand %p220, %p221
      %p223 = pneg %p222
      // Predicated region
      $region41: #{tpu_custom_call.1} parent=5 // pred_check
        _
      $region42: #{tpu_custom_call.1} parent=5 // pred_check_branch
        %225 = sbr.rel (%p222) target = $region44
      $region43: #{tpu_custom_call.1} parent=5 // pred_region
        %s226 = ssub.s32 %s22, 1
        %p227 = scmp.lt.s32.totalorder %s27, 1
        %s228 = scalar_select %p227, %s27, 1
        %s229 = smul.addr %s228, 2
        %s230 = scalar_lea.vmem %s1, %s229
        %p231 = pneg %p48
        %p232 = pneg %p45
        %p233 = pneg %p69
        %p234 = pneg %p66
        %p235 = pneg %p90
        %p236 = pneg %p87
        %p237 = pneg %p111
        %p238 = pneg %p108
        %p239 = pneg %p132
        %p240 = pneg %p129
        %p241 = pneg %p153
        %p242 = pneg %p150
        %p243 = pneg %p179
        %p244 = pneg %p176
        %s245 = sand.u32 %s166, 1
        %s246 = scalar_lea.sflag [#allocation5], %s245
        %s247 = sand.u32 %s166, 1
        %s248 = smul.addr %s247, 2
        %s249 = scalar_lea.vmem [#allocation4], %s248
        %p250 = scmp.lt.s32.totalorder %s27, 1
        %s251 = scalar_select %p250, %s27, 1
        %s252 = smul.addr %s251, 2
        %s253 = scalar_lea.vmem %s1, %s252
        %s255 = sld [smem:[#allocation3 + %s27]]
        %v256 = vld [vmem:[%s253] sm:$0x3]
        %v257 = vlaneseq
        %v258 = vand.u32 %v257, 127
        %v259 = vstv %s255
        %vm260 = vcmp.lt.s32.totalorder %v258, %v259
        %v261 = vsel %vm260, 1, 0
        %v262 = vcvt.s32.f32 %v261
        %s263 = scvt.s32.f32 %s255
        %v264 = vstv %s263
        %v265 = vrcp.pop %v264
        %s266 = vtos %v265
        %v267 = vunpack.c.l.bf16 %v256
        %v268 = vmul.f32 %v262, %v267
        %vm269 = vcmask 1043456
        %v270 = vsel %vm269, %v268, 0.0
        %271 = vadd.xlane.f32.xlu0 %v270
        %v272 = vpop.xlane.xlu0 %271
        %v273 = vstv %s266
        %v274 = vmul.f32 %v272, %v273
        %v275 = vsub.f32 %v267, %v274
        %v276 = vmul.f32 %v275, %v275
        %v277 = vmul.f32 %v262, %v276
        %v278 = vsel %vm269, %v277, 0.0
        %279 = vadd.xlane.f32.xlu0 %v278
        %v280 = vpop.xlane.xlu0 %279
        %v281 = vmul.f32 %v280, %v273
        %v282 = vmax.f32 %v281, 1e-12
        %v283 = vrsqrt.pop %v282
        %v284 = vmul.f32 %v282, %v283
        %vm285 = vcmp.eq.f32.partialorder %v282, inf
        %v286 = vsel %vm285, %v282, %v284
        %vm287 = vcmp.eq.f32.partialorder %v282, 0.0
        %v288 = vand.u32 %v282, 2147483648
        %v289 = vsel %vm287, %v288, %v286
        %v291 = vrot.slane %v289, 4
        %v293 = vsel %vm269, %v274, %v291
        %294 = vxpose.xlu0.b32.start [1/16] %v293, 128
        %295 = vxpose.xlu0.b32.cont [2/16] 0.0, 128
        %296 = vxpose.xlu0.b32.cont [3/16] 0.0, 128
        %297 = vxpose.xlu0.b32.cont [4/16] 0.0, 128
        %298 = vxpose.xlu0.b32.cont [5/16] 0.0, 128
        %299 = vxpose.xlu0.b32.cont [6/16] 0.0, 128
        %300 = vxpose.xlu0.b32.cont [7/16] 0.0, 128
        %301 = vxpose.xlu0.b32.cont [8/16] 0.0, 128
        %302 = vxpose.xlu0.b32.cont [9/16] 0.0, 128
        %303 = vxpose.xlu0.b32.cont [10/16] 0.0, 128
        %304 = vxpose.xlu0.b32.cont [11/16] 0.0, 128
        %305 = vxpose.xlu0.b32.cont [12/16] 0.0, 128
        %306 = vxpose.xlu0.b32.cont [13/16] 0.0, 128
        %307 = vxpose.xlu0.b32.cont [14/16] 0.0, 128
        %308 = vxpose.xlu0.b32.cont [15/16] 0.0, 128
        %309 = vxpose.xlu0.b32.end [16/16] 0.0, 128
        %v310 = vpop.trf.xlu0
        %v311 = vpop.trf.xlu0
        %v312 = vpop.trf.xlu0
        %v313 = vpop.trf.xlu0
        %v314 = vpop.trf.xlu0
        %v315 = vpop.trf.xlu0
        %v316 = vpop.trf.xlu0
        %v317 = vpop.trf.xlu0
        %v318 = vpop.trf.xlu0
        %v319 = vpop.trf.xlu0
        %v320 = vpop.trf.xlu0
        %v321 = vpop.trf.xlu0
        %v322 = vpop.trf.xlu0
        %v323 = vpop.trf.xlu0
        %v324 = vpop.trf.xlu0
        %v325 = vpop.trf.xlu0
        %v326 = vld [vmem:[%s3] sm:$0xff]
        %v327 = vlaneseq
        %v328 = vshrl.u32 %v327, 7
        %v329 = vsub.s32 0, %v328
        %v330 = vrot.slane %v310, %v329
        %v331 = vmul.f32 %v326, %v330
        %vm332 = vcmask 64512
        %v333 = vsel %vm332, %v331, 0.0
        %334 = vadd.xlane.f32.xlu0 %v333
        %v335 = vpop.xlane.xlu0 %334
        %v336 = vld [vmem:[%s4] sm:$0xff]
        %v337 = vadd.f32 %v335, %v336
        %v338 = vld [vmem:[%s2] sm:$0xf]
        %340 = vset.pattern.permute.xlu0 0
        %341 = vperm.xlu0 %340, %v337
        %v342 = vpop.permute.xlu0 %341
        %vm344 = vcmask 31744
        %v346 = vsel %vm344, %v338, 0
        %vm348 = vcmask 1041408
        %v350 = vsel %vm348, %v256, 0
        %352 = vmatprep.subr.bf16.mxu0 0
        %353 = vmatpush1.bf16.msra.mxu0 %v350
        %354 = vmatprep.subr.bf16.mxu0 0
        %355 = vmatpush1.bf16.msra.mxu0 0
        %356 = vmatprep.subr.bf16.mxu0 0
        %357 = vmatpush1.bf16.msra.mxu0 0
        %358 = vmatprep.subr.bf16.mxu0 0
        %359 = vmatpush1.bf16.msra.mxu0 0
        %360 = vmatprep.subr.bf16.mxu0 0
        %361 = vmatpush1.bf16.msra.mxu0 0
        %362 = vmatprep.subr.bf16.mxu0 0
        %363 = vmatpush1.bf16.msra.mxu0 0
        %364 = vmatprep.subr.bf16.mxu0 0
        %365 = vmatpush1.bf16.msra.mxu0 0
        %366 = vmatprep.subr.bf16.mxu0 0
        %367 = vmatpush1.bf16.msra.mxu0 0
        %368 = vmatprep.subr.bf16.mxu0 0
        %369 = vmatpush1.bf16.msra.mxu0 0
        %370 = vmatprep.subr.bf16.mxu0 0
        %371 = vmatpush1.bf16.msra.mxu0 0
        %372 = vmatprep.subr.bf16.mxu0 0
        %373 = vmatpush1.bf16.msra.mxu0 0
        %374 = vmatprep.subr.bf16.mxu0 0
        %375 = vmatpush1.bf16.msra.mxu0 0
        %376 = vmatprep.subr.bf16.mxu0 0
        %377 = vmatpush1.bf16.msra.mxu0 0
        %378 = vmatprep.subr.bf16.mxu0 0
        %379 = vmatpush1.bf16.msra.mxu0 0
        %380 = vmatprep.subr.bf16.mxu0 0
        %381 = vmatpush1.bf16.msra.mxu0 0
        %382 = vmatprep.subr.bf16.mxu0 0
        %383 = vmatpush1.bf16.msra.mxu0 0
        %384 = vmatprep.mubr.bf16.mxu0 0
        %385 = vmatmul.mubr.bf16.gmra.mrb[0].mxu0 %v346
        %v386 = vpop.f32.mrb[0].mxu0
        %v387 = vadd.f32 %v342, %v386
        %v388 = vpop.f32.mrb[0].mxu0
        %v389 = vpop.f32.mrb[0].mxu0
        %v390 = vpop.f32.mrb[0].mxu0
        %391 = vdwg.mxu0
        %v392 = vmax.f32 %v387, 0.0
        %394 = vset.pattern.permute.xlu0 1
        %395 = vperm.xlu0 %394, %v336
        %v396 = vpop.permute.xlu0 %395
        %v398 = vmul.f32 %v392, %v396
        %399 = vset.pattern.permute.xlu0 2
        %400 = vperm.xlu0 %399, %v336
        %v401 = vpop.permute.xlu0 %400
        %v403 = vadd.f32 %v398, %v401
        %v404 = vpack.c.bf16 %v403, %v403
        %v405 = vtanh.bf16.pop %v404
        %v406 = vld [vmem:[%s5] sm:$0x3]
        %v407 = vld [vmem:[%s6] sm:$0xf]
        %409 = vset.pattern.permute.xlu0 0
        %410 = vperm.xlu0 %409, %v407
        %v411 = vpop.permute.xlu0 %410
        %v414 = vsel %vm332, %v406, 0
        %v417 = vsel %vm269, %v405, 0
        %419 = vmatprep.subr.bf16.mxu0 0
        %420 = vmatpush1.bf16.msra.mxu0 %v417
        %421 = vmatprep.subr.bf16.mxu0 0
        %422 = vmatpush1.bf16.msra.mxu0 0
        %423 = vmatprep.subr.bf16.mxu0 0
        %424 = vmatpush1.bf16.msra.mxu0 0
        %425 = vmatprep.subr.bf16.mxu0 0
        %426 = vmatpush1.bf16.msra.mxu0 0
        %427 = vmatprep.subr.bf16.mxu0 0
        %428 = vmatpush1.bf16.msra.mxu0 0
        %429 = vmatprep.subr.bf16.mxu0 0
        %430 = vmatpush1.bf16.msra.mxu0 0
        %431 = vmatprep.subr.bf16.mxu0 0
        %432 = vmatpush1.bf16.msra.mxu0 0
        %433 = vmatprep.subr.bf16.mxu0 0
        %434 = vmatpush1.bf16.msra.mxu0 0
        %435 = vmatprep.subr.bf16.mxu0 0
        %436 = vmatpush1.bf16.msra.mxu0 0
        %437 = vmatprep.subr.bf16.mxu0 0
        %438 = vmatpush1.bf16.msra.mxu0 0
        %439 = vmatprep.subr.bf16.mxu0 0
        %440 = vmatpush1.bf16.msra.mxu0 0
        %441 = vmatprep.subr.bf16.mxu0 0
        %442 = vmatpush1.bf16.msra.mxu0 0
        %443 = vmatprep.subr.bf16.mxu0 0
        %444 = vmatpush1.bf16.msra.mxu0 0
        %445 = vmatprep.subr.bf16.mxu0 0
        %446 = vmatpush1.bf16.msra.mxu0 0
        %447 = vmatprep.subr.bf16.mxu0 0
        %448 = vmatpush1.bf16.msra.mxu0 0
        %449 = vmatprep.subr.bf16.mxu0 0
        %450 = vmatpush1.bf16.msra.mxu0 0
        %451 = vmatprep.mubr.bf16.mxu0 0
        %452 = vmatmul.mubr.bf16.gmra.mrb[0].mxu0 %v414
        %v453 = vpop.f32.mrb[0].mxu0
        %v454 = vadd.f32 %v411, %v453
        %v455 = vpop.f32.mrb[0].mxu0
        %v456 = vpop.f32.mrb[0].mxu0
        %v457 = vpop.f32.mrb[0].mxu0
        %458 = vdwg.mxu0
        %vm459 = vcmp.eq.s32.totalorder %v261, 1
        %v460 = vsel %vm459, %v454, -1e+30
        %v461 = vsel %vm269, %v460, -inf
        %462 = vmax.xlane.f32.xlu0 %v461
        %v463 = vpop.xlane.xlu0 %462
        %v464 = vsub.f32 %v460, %v463
        %v465 = vmul.f32 %v464, 1.442695
        %v466 = vpow.pop %v465
        %v467 = vsel %vm269, %v466, 0.0
        %468 = vadd.xlane.f32.xlu0 %v467
        %v469 = vpop.xlane.xlu0 %468
        %v470 = vrcp.pop %v469
        %v471 = vmul.f32 1.0, %v470
        %v472 = vmul.f32 %v466, %v267
        %v473 = vsel %vm269, %v472, 0.0
        %474 = vadd.xlane.f32.xlu0 %v473
        %v475 = vpop.xlane.xlu0 %474
        %v476 = vmul.f32 %v475, %v471
        %v477 = vsub.f32 %v267, %v476
        %v478 = vmul.f32 %v477, %v477
        %v479 = vmul.f32 %v466, %v478
        %v480 = vsel %vm269, %v479, 0.0
        %481 = vadd.xlane.f32.xlu0 %v480
        %v482 = vpop.xlane.xlu0 %481
        %v483 = vmul.f32 %v482, %v471
        %v484 = vmax.f32 %v483, 1e-12
        %v485 = vrsqrt.pop %v484
        %v486 = vmul.f32 %v484, %v485
        %vm487 = vcmp.eq.f32.partialorder %v484, inf
        %v488 = vsel %vm487, %v484, %v486
        %vm489 = vcmp.eq.f32.partialorder %v484, 0.0
        %v490 = vand.u32 %v484, 2147483648
        %v491 = vsel %vm489, %v490, %v488
        %vm492 = vcmask 7168
        %v493 = vsel %vm492, %v476, %v491
        %494 = vxpose.xlu0.b32.start [1/16] %v493, 128
        %495 = vxpose.xlu0.b32.cont [2/16] 0.0, 128
        %496 = vxpose.xlu0.b32.cont [3/16] 0.0, 128
        %497 = vxpose.xlu0.b32.cont [4/16] 0.0, 128
        %498 = vxpose.xlu0.b32.cont [5/16] 0.0, 128
        %499 = vxpose.xlu0.b32.cont [6/16] 0.0, 128
        %500 = vxpose.xlu0.b32.cont [7/16] 0.0, 128
        %501 = vxpose.xlu0.b32.cont [8/16] 0.0, 128
        %502 = vxpose.xlu0.b32.cont [9/16] 0.0, 128
        %503 = vxpose.xlu0.b32.cont [10/16] 0.0, 128
        %504 = vxpose.xlu0.b32.cont [11/16] 0.0, 128
        %505 = vxpose.xlu0.b32.cont [12/16] 0.0, 128
        %506 = vxpose.xlu0.b32.cont [13/16] 0.0, 128
        %507 = vxpose.xlu0.b32.cont [14/16] 0.0, 128
        %508 = vxpose.xlu0.b32.cont [15/16] 0.0, 128
        %509 = vxpose.xlu0.b32.end [16/16] 0.0, 128
        %v510 = vpop.trf.xlu0
        %v511 = vpop.trf.xlu0
        %v512 = vpop.trf.xlu0
        %v513 = vpop.trf.xlu0
        %v514 = vpop.trf.xlu0
        %v515 = vpop.trf.xlu0
        %v516 = vpop.trf.xlu0
        %v517 = vpop.trf.xlu0
        %v518 = vpop.trf.xlu0
        %v519 = vpop.trf.xlu0
        %v520 = vpop.trf.xlu0
        %v521 = vpop.trf.xlu0
        %v522 = vpop.trf.xlu0
        %v523 = vpop.trf.xlu0
        %v524 = vpop.trf.xlu0
        %v525 = vpop.trf.xlu0
        %vm526 = vcmask 25600
        %527 = vst.msk [vmem:[%s249] sm:$0x3] %vm526, %v510
        %s528 = sand.u32 %s166, 1
        %s529 = scalar_lea.sflag [#allocation5], %s528
        %s530 = sand.u32 %s166, 1
        %s531 = smul.addr %s530, 2
        %s532 = scalar_lea.vmem [#allocation4], %s531
        // Predicated region
        $region45: #{tpu_custom_call.1} parent=43 // pred_check
          %p533 = pneg %p176
        $region46: #{tpu_custom_call.1} parent=43 // pred_check_branch
          %535 = sbr.rel (%p533) target = $region48
        $region47: #{tpu_custom_call.1} parent=43 // pred_region
          %s537 = ssub.s32 32, 32
          %538 = vsyncadd %s529, %s537
          %s539 = smul.addr %s27, 32
          %s540 = scalar_lea.hbm %s7, %s539
          %s542 = sshll.u32 %s532, 4
          %s543 = int_to_ptr.vmem [resolvable:$true] %s542
          %545 = dma.vmem_to_hbm [thread:$0]  %s543, 32, %s540, %s529
        $region48: #{tpu_custom_call.1} parent=43 // pred_fallthru
          _
      $region44: #{tpu_custom_call.1} parent=5 // pred_fallthru
        _
      %p546 = scmp.le.s32.totalorder 2, %s22
      // Predicated region
      $region49: #{tpu_custom_call.1} parent=5 // pred_check
        %p547 = pneg %p546
      $region50: #{tpu_custom_call.1} parent=5 // pred_check_branch
        %549 = sbr.rel (%p547) target = $region52
      $region51: #{tpu_custom_call.1} parent=5 // pred_region
        %s550 = ssub.s32 %s22, 2
        // Predicated region
        $region53: #{tpu_custom_call.1} parent=51 // pred_check
          %p551 = pneg %p182
        $region54: #{tpu_custom_call.1} parent=51 // pred_check_branch
          %553 = sbr.rel (%p551) target = $region56
        $region55: #{tpu_custom_call.1} parent=51 // pred_region
          %s554 = sand.u32 %s167, 1
          %s555 = scalar_lea.sflag [#allocation5], %s554
          %s556 = sand.u32 %s167, 1
          %s557 = smul.addr %s556, 2
          %s558 = scalar_lea.vmem [#allocation4], %s557
          %559 = dma.done %s555, 32
        $region56: #{tpu_custom_call.1} parent=51 // pred_fallthru
          _
      $region52: #{tpu_custom_call.1} parent=5 // pred_fallthru
        _
    $region6: #{tpu_custom_call.1} parent=1 // loop_footer
      %s26 = sadd.s32 1, %s22
    $region7: #{tpu_custom_call.1} parent=1 // loop_footer_branch
      %21 = sbr.rel target = $region3
    $region8: #{tpu_custom_call.1} parent=1 // loop_exit
      _
    %560 = vsyncpa [#allocation5], 1
    %s561 = scalar_lea.sflag [#allocation5], 1
    %562 = vsyncpa %s561, 1

// kernel: tpu_custom_call.1
$region0: #{tpu_custom_call.1}
  #allocation0 [shape = 'u32[]', space=smem, size = 0x4, offset = 0x4, fixed_abs, tag = 'smem constant byte address 0x4 - core index']
  #allocation1 [shape = 'u32[144,128]{1,0:T(1,128)}', space=vmem, size = 0x12000, scoped, tag = 'internal scratch']
  #allocation2 [shape = 's32[1]{0}', space=sflag, size = 0x4, scoped, tag = 'scoped memory for tpu_custom_call.1']
  #allocation3 [shape = 'u8[512]{0}', space=smem, size = 0x200, scoped, tag = 'prefetched SMEM operand 0']
  %s0 = inlined_call_operand.vmem [shape: s32[2], index: 0, kind: input, shape index: {}]
  %s1 = inlined_call_operand.vmem [shape: bf16[2,4,128], index: 1, kind: input, shape index: {}]
  %s2 = inlined_call_operand.vmem [shape: bf16[8,4], index: 2, kind: input, shape index: {}]
  %s3 = inlined_call_operand.vmem [shape: f32[8,8], index: 3, kind: input, shape index: {}]
  %s4 = inlined_call_operand.vmem [shape: f32[8,3], index: 4, kind: input, shape index: {}]
  %s5 = inlined_call_operand.vmem [shape: bf16[4,8], index: 5, kind: input, shape index: {}]
  %s6 = inlined_call_operand.vmem [shape: f32[4,1], index: 6, kind: input, shape index: {}]
  %s7 = inlined_call_operand.hbm [shape: f32[2,2,4], index: 7, kind: output, shape index: {}]
  %s8 = sld [smem:[#allocation0]]
  $region57: #{tpu_custom_call.1} parent=0
    _
  %s10 = ssub.s32 1, %s8
  %s11 = scalar_select 0, %s10, %s8
  %s12 = sshll.u32 %s0, 4
  %s13 = int_to_ptr.vmem [resolvable:$true] %s12
  %15 = dma.vmem_to_smem %s13, 16, [#allocation3], [#allocation2]
  %16 = dma.done [#allocation2], 16
  %17 = sfence
  $region1: #{tpu_custom_call.1} parent=0
    #allocation4 [shape = 'u8[2048]{0}', space=vmem, size = 0x800, scoped, tag = 'output window, operand 0']
    #allocation5 [shape = 's32[2]{0}', space=sflag, size = 0x8, scoped, tag = 'scoped memory for tpu_custom_call.1']
    %18 = vsyncpa [#allocation5], 0
    %s19 = scalar_lea.sflag [#allocation5], 1
    %20 = vsyncpa %s19, 0
    loop: start=0, step=1, limit=4
    $region2: #{tpu_custom_call.1} parent=1 // loop_pre_header
      _
    $region3: #{tpu_custom_call.1} parent=1 // loop_header
      %s22 = sphi 0, %s26
      %p23 = scmp.ge.s32.totalorder %s22, 4
      %s32 = sphi 0, %s34
      %s35 = sphi 0, %s32
      %s36 = sphi 0, %s35
      %s52 = sphi 0, %s36
      %s56 = sphi 0, %s56
      %s58 = sphi 0, %s56
      %s59 = sphi 0, %s58
      %s73 = sphi 0, %s59
      %s77 = sphi 0, %s77
      %s79 = sphi 0, %s77
      %s80 = sphi 0, %s79
      %s94 = sphi 0, %s80
      %s98 = sphi 0, %s98
      %s100 = sphi 0, %s98
      %s101 = sphi 0, %s100
      %s115 = sphi 0, %s101
      %s119 = sphi 0, %s119
      %s121 = sphi 0, %s119
      %s122 = sphi 0, %s121
      %s136 = sphi 0, %s122
      %s140 = sphi 0, %s140
      %s142 = sphi 0, %s140
      %s143 = sphi 0, %s142
      %s157 = sphi 0, %s143
      %s163 = sphi 0, %s165
      %s166 = sphi 0, %s163
      %s167 = sphi 0, %s166
      %s183 = sphi 0, %s167
    $region4: #{tpu_custom_call.1} parent=1 // loop_header_branch
      %25 = sbr.rel (%p23) target = $region8
    $region5: #{tpu_custom_call.1} parent=1 // loop_body
      %s27 = ssub.s32 %s22, 1
      %s28 = ssub.s32 %s22, 2
      %s29 = sadd.s32 %s22, 1
      %s30 = ssub.s32 %s22, %s29
      %p31 = scmp.eq.s32.totalorder %s30, 0
      %s33 = sadd.s32 %s32, 1
      %s34 = scalar_select %p31, %s32, %s33
      %p37 = pneg %p31
      %p38 = scmp.eq.s32.totalorder %s22, 1
      %p39 = por %p37, %p38
      %p40 = scmp.ne.s32.totalorder %s32, %s35
      %p41 = scmp.eq.s32.totalorder %s22, 0
      %p42 = por %p40, %p41
      %p43 = scmp.ne.s32.totalorder %s32, %s35
      %p44 = scmp.eq.s32.totalorder %s27, 1
      %p45 = por %p43, %p44
      %p46 = scmp.ne.s32.totalorder %s35, %s36
      %p47 = scmp.eq.s32.totalorder %s27, 0
      %p48 = por %p46, %p47
      %p49 = scmp.ne.s32.totalorder %s35, %s36
      %p50 = scmp.eq.s32.totalorder %s28, 1
      %p51 = por %p49, %p50
      %p53 = scmp.ne.s32.totalorder %s36, %s52
      %p54 = scmp.eq.s32.totalorder %s28, 0
      %p55 = por %p53, %p54
      %s57 = sadd.s32 %s56, 1
      %p60 = scmp.eq.s32.totalorder %s22, 1
      %p61 = scmp.ne.s32.totalorder %s56, %s58
      %p62 = scmp.eq.s32.totalorder %s22, 0
      %p63 = por %p61, %p62
      %p64 = scmp.ne.s32.totalorder %s56, %s58
      %p65 = scmp.eq.s32.totalorder %s27, 1
      %p66 = por %p64, %p65
      %p67 = scmp.ne.s32.totalorder %s58, %s59
      %p68 = scmp.eq.s32.totalorder %s27, 0
      %p69 = por %p67, %p68
      %p70 = scmp.ne.s32.totalorder %s58, %s59
      %p71 = scmp.eq.s32.totalorder %s28, 1
      %p72 = por %p70, %p71
      %p74 = scmp.ne.s32.totalorder %s59, %s73
      %p75 = scmp.eq.s32.totalorder %s28, 0
      %p76 = por %p74, %p75
      %s78 = sadd.s32 %s77, 1
      %p81 = scmp.eq.s32.totalorder %s22, 1
      %p82 = scmp.ne.s32.totalorder %s77, %s79
      %p83 = scmp.eq.s32.totalorder %s22, 0
      %p84 = por %p82, %p83
      %p85 = scmp.ne.s32.totalorder %s77, %s79
      %p86 = scmp.eq.s32.totalorder %s27, 1
      %p87 = por %p85, %p86
      %p88 = scmp.ne.s32.totalorder %s79, %s80
      %p89 = scmp.eq.s32.totalorder %s27, 0
      %p90 = por %p88, %p89
      %p91 = scmp.ne.s32.totalorder %s79, %s80
      %p92 = scmp.eq.s32.totalorder %s28, 1
      %p93 = por %p91, %p92
      %p95 = scmp.ne.s32.totalorder %s80, %s94
      %p96 = scmp.eq.s32.totalorder %s28, 0
      %p97 = por %p95, %p96
      %s99 = sadd.s32 %s98, 1
      %p102 = scmp.eq.s32.totalorder %s22, 1
      %p103 = scmp.ne.s32.totalorder %s98, %s100
      %p104 = scmp.eq.s32.totalorder %s22, 0
      %p105 = por %p103, %p104
      %p106 = scmp.ne.s32.totalorder %s98, %s100
      %p107 = scmp.eq.s32.totalorder %s27, 1
      %p108 = por %p106, %p107
      %p109 = scmp.ne.s32.totalorder %s100, %s101
      %p110 = scmp.eq.s32.totalorder %s27, 0
      %p111 = por %p109, %p110
      %p112 = scmp.ne.s32.totalorder %s100, %s101
      %p113 = scmp.eq.s32.totalorder %s28, 1
      %p114 = por %p112, %p113
      %p116 = scmp.ne.s32.totalorder %s101, %s115
      %p117 = scmp.eq.s32.totalorder %s28, 0
      %p118 = por %p116, %p117
      %s120 = sadd.s32 %s119, 1
      %p123 = scmp.eq.s32.totalorder %s22, 1
      %p124 = scmp.ne.s32.totalorder %s119, %s121
      %p125 = scmp.eq.s32.totalorder %s22, 0
      %p126 = por %p124, %p125
      %p127 = scmp.ne.s32.totalorder %s119, %s121
      %p128 = scmp.eq.s32.totalorder %s27, 1
      %p129 = por %p127, %p128
      %p130 = scmp.ne.s32.totalorder %s121, %s122
      %p131 = scmp.eq.s32.totalorder %s27, 0
      %p132 = por %p130, %p131
      %p133 = scmp.ne.s32.totalorder %s121, %s122
      %p134 = scmp.eq.s32.totalorder %s28, 1
      %p135 = por %p133, %p134
      %p137 = scmp.ne.s32.totalorder %s122, %s136
      %p138 = scmp.eq.s32.totalorder %s28, 0
      %p139 = por %p137, %p138
      %s141 = sadd.s32 %s140, 1
      %p144 = scmp.eq.s32.totalorder %s22, 1
      %p145 = scmp.ne.s32.totalorder %s140, %s142
      %p146 = scmp.eq.s32.totalorder %s22, 0
      %p147 = por %p145, %p146
      %p148 = scmp.ne.s32.totalorder %s140, %s142
      %p149 = scmp.eq.s32.totalorder %s27, 1
      %p150 = por %p148, %p149
      %p151 = scmp.ne.s32.totalorder %s142, %s143
      %p152 = scmp.eq.s32.totalorder %s27, 0
      %p153 = por %p151, %p152
      %p154 = scmp.ne.s32.totalorder %s142, %s143
      %p155 = scmp.eq.s32.totalorder %s28, 1
      %p156 = por %p154, %p155
      %p158 = scmp.ne.s32.totalorder %s143, %s157
      %p159 = scmp.eq.s32.totalorder %s28, 0
      %p160 = por %p158, %p159
      %s161 = ssub.s32 %s22, %s29
      %p162 = scmp.eq.s32.totalorder %s161, 0
      %s164 = sadd.s32 %s163, 1
      %s165 = scalar_select %p162, %s163, %s164
      %p168 = pneg %p162
      %p169 = scmp.eq.s32.totalorder %s22, 1
      %p170 = por %p168, %p169
      %p171 = scmp.ne.s32.totalorder %s163, %s166
      %p172 = scmp.eq.s32.totalorder %s22, 0
      %p173 = por %p171, %p172
      %p174 = scmp.ne.s32.totalorder %s163, %s166
      %p175 = scmp.eq.s32.totalorder %s27, 1
      %p176 = por %p174, %p175
      %p177 = scmp.ne.s32.totalorder %s166, %s167
      %p178 = scmp.eq.s32.totalorder %s27, 0
      %p179 = por %p177, %p178
      %p180 = scmp.ne.s32.totalorder %s166, %s167
      %p181 = scmp.eq.s32.totalorder %s28, 1
      %p182 = por %p180, %p181
      %p184 = scmp.ne.s32.totalorder %s167, %s183
      %p185 = scmp.eq.s32.totalorder %s28, 0
      %p186 = por %p184, %p185
      %p187 = scmp.le.s32.totalorder 1, %s22
      %p188 = scmp.lt.s32.totalorder %s22, 3
      %p189 = pnand %p187, %p188
      %p190 = pneg %p189
      // Predicated region
      $region9: #{tpu_custom_call.1} parent=5 // pred_check
        _
      $region10: #{tpu_custom_call.1} parent=5 // pred_check_branch
        %192 = sbr.rel (%p189) target = $region12
      $region11: #{tpu_custom_call.1} parent=5 // pred_region
        %s193 = ssub.s32 %s22, 1
        // Predicated region
        $region13: #{tpu_custom_call.1} parent=11 // pred_check
          %p194 = pneg %p69
        $region14: #{tpu_custom_call.1} parent=11 // pred_check_branch
          %196 = sbr.rel (%p194) target = $region16
        $region15: #{tpu_custom_call.1} parent=11 // pred_region
          _
        $region16: #{tpu_custom_call.1} parent=11 // pred_fallthru
          _
        // Predicated region
        $region17: #{tpu_custom_call.1} parent=11 // pred_check
          %p197 = pneg %p90
        $region18: #{tpu_custom_call.1} parent=11 // pred_check_branch
          %199 = sbr.rel (%p197) target = $region20
        $region19: #{tpu_custom_call.1} parent=11 // pred_region
          _
        $region20: #{tpu_custom_call.1} parent=11 // pred_fallthru
          _
        // Predicated region
        $region21: #{tpu_custom_call.1} parent=11 // pred_check
          %p200 = pneg %p111
        $region22: #{tpu_custom_call.1} parent=11 // pred_check_branch
          %202 = sbr.rel (%p200) target = $region24
        $region23: #{tpu_custom_call.1} parent=11 // pred_region
          _
        $region24: #{tpu_custom_call.1} parent=11 // pred_fallthru
          _
        // Predicated region
        $region25: #{tpu_custom_call.1} parent=11 // pred_check
          %p203 = pneg %p132
        $region26: #{tpu_custom_call.1} parent=11 // pred_check_branch
          %205 = sbr.rel (%p203) target = $region28
        $region27: #{tpu_custom_call.1} parent=11 // pred_region
          _
        $region28: #{tpu_custom_call.1} parent=11 // pred_fallthru
          _
        // Predicated region
        $region29: #{tpu_custom_call.1} parent=11 // pred_check
          %p206 = pneg %p153
        $region30: #{tpu_custom_call.1} parent=11 // pred_check_branch
          %208 = sbr.rel (%p206) target = $region32
        $region31: #{tpu_custom_call.1} parent=11 // pred_region
          _
        $region32: #{tpu_custom_call.1} parent=11 // pred_fallthru
          _
      $region12: #{tpu_custom_call.1} parent=5 // pred_fallthru
        _
      %p209 = scmp.lt.s32.totalorder %s22, 2
      // Predicated region
      $region33: #{tpu_custom_call.1} parent=5 // pred_check
        %p210 = pneg %p209
      $region34: #{tpu_custom_call.1} parent=5 // pred_check_branch
        %212 = sbr.rel (%p210) target = $region36
      $region35: #{tpu_custom_call.1} parent=5 // pred_region
        // Predicated region
        $region37: #{tpu_custom_call.1} parent=35 // pred_check
          %p213 = pneg %p42
        $region38: #{tpu_custom_call.1} parent=35 // pred_check_branch
          %215 = sbr.rel (%p213) target = $region40
        $region39: #{tpu_custom_call.1} parent=35 // pred_region
          %p216 = scmp.lt.s32.totalorder %s22, 1
          %s217 = scalar_select %p216, %s22, 1
          %s218 = smul.addr %s217, 2
          %s219 = scalar_lea.vmem %s1, %s218
        $region40: #{tpu_custom_call.1} parent=35 // pred_fallthru
          _
      $region36: #{tpu_custom_call.1} parent=5 // pred_fallthru
        _
      %p220 = scmp.le.s32.totalorder 1, %s22
      %p221 = scmp.lt.s32.totalorder %s22, 3
      %p222 = pnand %p220, %p221
      %p223 = pneg %p222
      // Predicated region
      $region41: #{tpu_custom_call.1} parent=5 // pred_check
        _
      $region42: #{tpu_custom_call.1} parent=5 // pred_check_branch
        %225 = sbr.rel (%p222) target = $region44
      $region43: #{tpu_custom_call.1} parent=5 // pred_region
        %s226 = ssub.s32 %s22, 1
        %p227 = scmp.lt.s32.totalorder %s27, 1
        %s228 = scalar_select %p227, %s27, 1
        %s229 = smul.addr %s228, 2
        %s230 = scalar_lea.vmem %s1, %s229
        %p231 = pneg %p48
        %p232 = pneg %p45
        %p233 = pneg %p69
        %p234 = pneg %p66
        %p235 = pneg %p90
        %p236 = pneg %p87
        %p237 = pneg %p111
        %p238 = pneg %p108
        %p239 = pneg %p132
        %p240 = pneg %p129
        %p241 = pneg %p153
        %p242 = pneg %p150
        %p243 = pneg %p179
        %p244 = pneg %p176
        %s245 = sand.u32 %s166, 1
        %s246 = scalar_lea.sflag [#allocation5], %s245
        %s247 = sand.u32 %s166, 1
        %s248 = smul.addr %s247, 2
        %s249 = scalar_lea.vmem [#allocation4], %s248
        %p250 = scmp.lt.s32.totalorder %s27, 1
        %s251 = scalar_select %p250, %s27, 1
        %s252 = smul.addr %s251, 2
        %s253 = scalar_lea.vmem %s1, %s252
        %s255 = sld [smem:[#allocation3 + %s27]]
        %v256 = vld [vmem:[%s253] sm:$0x3]
        %v257 = vlaneseq
        %v258 = vand.u32 %v257, 127
        %v259 = vstv %s255
        %vm260 = vcmp.lt.s32.totalorder %v258, %v259
        %v261 = vsel %vm260, 1, 0
        %v262 = vcvt.s32.f32 %v261
        %s263 = scvt.s32.f32 %s255
        %v264 = vstv %s263
        %v265 = vrcp.pop %v264
        %s266 = vtos %v265
        %v267 = vunpack.c.l.bf16 %v256
        %v268 = vmul.f32 %v262, %v267
        %vm269 = vcmask 1043456
        %v270 = vsel %vm269, %v268, 0.0
        %271 = vadd.xlane.f32.xlu0 %v270
        %v272 = vpop.xlane.xlu0 %271
        %v273 = vstv %s266
        %v274 = vmul.f32 %v272, %v273
        %v275 = vsub.f32 %v267, %v274
        %v276 = vmul.f32 %v275, %v275
        %v277 = vmul.f32 %v262, %v276
        %v278 = vsel %vm269, %v277, 0.0
        %279 = vadd.xlane.f32.xlu0 %v278
        %v280 = vpop.xlane.xlu0 %279
        %v281 = vmul.f32 %v280, %v273
        %v282 = vmax.f32 %v281, 1e-12
        %v283 = vrsqrt.pop %v282
        %v284 = vmul.f32 %v282, %v283
        %vm285 = vcmp.eq.f32.partialorder %v282, inf
        %v286 = vsel %vm285, %v282, %v284
        %vm287 = vcmp.eq.f32.partialorder %v282, 0.0
        %v288 = vand.u32 %v282, 2147483648
        %v289 = vsel %vm287, %v288, %v286
        %v291 = vrot.slane %v289, 4
        %v293 = vsel %vm269, %v274, %v291
        %294 = vxpose.xlu0.b32.start [1/16] %v293, 128
        %295 = vxpose.xlu0.b32.cont [2/16] 0.0, 128
        %296 = vxpose.xlu0.b32.cont [3/16] 0.0, 128
        %297 = vxpose.xlu0.b32.cont [4/16] 0.0, 128
        %298 = vxpose.xlu0.b32.cont [5/16] 0.0, 128
        %299 = vxpose.xlu0.b32.cont [6/16] 0.0, 128
        %300 = vxpose.xlu0.b32.cont [7/16] 0.0, 128
        %301 = vxpose.xlu0.b32.cont [8/16] 0.0, 128
        %302 = vxpose.xlu0.b32.cont [9/16] 0.0, 128
        %303 = vxpose.xlu0.b32.cont [10/16] 0.0, 128
        %304 = vxpose.xlu0.b32.cont [11/16] 0.0, 128
        %305 = vxpose.xlu0.b32.cont [12/16] 0.0, 128
        %306 = vxpose.xlu0.b32.cont [13/16] 0.0, 128
        %307 = vxpose.xlu0.b32.cont [14/16] 0.0, 128
        %308 = vxpose.xlu0.b32.cont [15/16] 0.0, 128
        %309 = vxpose.xlu0.b32.end [16/16] 0.0, 128
        %v310 = vpop.trf.xlu0
        %v311 = vpop.trf.xlu0
        %v312 = vpop.trf.xlu0
        %v313 = vpop.trf.xlu0
        %v314 = vpop.trf.xlu0
        %v315 = vpop.trf.xlu0
        %v316 = vpop.trf.xlu0
        %v317 = vpop.trf.xlu0
        %v318 = vpop.trf.xlu0
        %v319 = vpop.trf.xlu0
        %v320 = vpop.trf.xlu0
        %v321 = vpop.trf.xlu0
        %v322 = vpop.trf.xlu0
        %v323 = vpop.trf.xlu0
        %v324 = vpop.trf.xlu0
        %v325 = vpop.trf.xlu0
        %v326 = vld [vmem:[%s3] sm:$0xff]
        %v327 = vlaneseq
        %v328 = vshrl.u32 %v327, 7
        %v329 = vsub.s32 0, %v328
        %v330 = vrot.slane %v310, %v329
        %v331 = vmul.f32 %v326, %v330
        %vm332 = vcmask 64512
        %v333 = vsel %vm332, %v331, 0.0
        %334 = vadd.xlane.f32.xlu0 %v333
        %v335 = vpop.xlane.xlu0 %334
        %v336 = vld [vmem:[%s4] sm:$0xff]
        %v337 = vadd.f32 %v335, %v336
        %v338 = vld [vmem:[%s2] sm:$0xf]
        %340 = vset.pattern.permute.xlu0 0
        %341 = vperm.xlu0 %340, %v337
        %v342 = vpop.permute.xlu0 %341
        %vm344 = vcmask 31744
        %v346 = vsel %vm344, %v338, 0
        %vm348 = vcmask 1041408
        %v350 = vsel %vm348, %v256, 0
        %352 = vmatprep.subr.bf16.mxu0 0
        %353 = vmatpush1.bf16.msra.mxu0 %v350
        %354 = vmatprep.subr.bf16.mxu0 0
        %355 = vmatpush1.bf16.msra.mxu0 0
        %356 = vmatprep.subr.bf16.mxu0 0
        %357 = vmatpush1.bf16.msra.mxu0 0
        %358 = vmatprep.subr.bf16.mxu0 0
        %359 = vmatpush1.bf16.msra.mxu0 0
        %360 = vmatprep.subr.bf16.mxu0 0
        %361 = vmatpush1.bf16.msra.mxu0 0
        %362 = vmatprep.subr.bf16.mxu0 0
        %363 = vmatpush1.bf16.msra.mxu0 0
        %364 = vmatprep.subr.bf16.mxu0 0
        %365 = vmatpush1.bf16.msra.mxu0 0
        %366 = vmatprep.subr.bf16.mxu0 0
        %367 = vmatpush1.bf16.msra.mxu0 0
        %368 = vmatprep.subr.bf16.mxu0 0
        %369 = vmatpush1.bf16.msra.mxu0 0
        %370 = vmatprep.subr.bf16.mxu0 0
        %371 = vmatpush1.bf16.msra.mxu0 0
        %372 = vmatprep.subr.bf16.mxu0 0
        %373 = vmatpush1.bf16.msra.mxu0 0
        %374 = vmatprep.subr.bf16.mxu0 0
        %375 = vmatpush1.bf16.msra.mxu0 0
        %376 = vmatprep.subr.bf16.mxu0 0
        %377 = vmatpush1.bf16.msra.mxu0 0
        %378 = vmatprep.subr.bf16.mxu0 0
        %379 = vmatpush1.bf16.msra.mxu0 0
        %380 = vmatprep.subr.bf16.mxu0 0
        %381 = vmatpush1.bf16.msra.mxu0 0
        %382 = vmatprep.subr.bf16.mxu0 0
        %383 = vmatpush1.bf16.msra.mxu0 0
        %384 = vmatprep.mubr.bf16.mxu0 0
        %385 = vmatmul.mubr.bf16.gmra.mrb[0].mxu0 %v346
        %v386 = vpop.f32.mrb[0].mxu0
        %v387 = vadd.f32 %v342, %v386
        %v388 = vpop.f32.mrb[0].mxu0
        %v389 = vpop.f32.mrb[0].mxu0
        %v390 = vpop.f32.mrb[0].mxu0
        %391 = vdwg.mxu0
        %v392 = vmax.f32 %v387, 0.0
        %394 = vset.pattern.permute.xlu0 1
        %395 = vperm.xlu0 %394, %v336
        %v396 = vpop.permute.xlu0 %395
        %v398 = vmul.f32 %v392, %v396
        %399 = vset.pattern.permute.xlu0 2
        %400 = vperm.xlu0 %399, %v336
        %v401 = vpop.permute.xlu0 %400
        %v403 = vadd.f32 %v398, %v401
        %v404 = vpack.c.bf16 %v403, %v403
        %v405 = vtanh.bf16.pop %v404
        %v406 = vld [vmem:[%s5] sm:$0x3]
        %v407 = vld [vmem:[%s6] sm:$0xf]
        %409 = vset.pattern.permute.xlu0 0
        %410 = vperm.xlu0 %409, %v407
        %v411 = vpop.permute.xlu0 %410
        %v414 = vsel %vm332, %v406, 0
        %v417 = vsel %vm269, %v405, 0
        %419 = vmatprep.subr.bf16.mxu0 0
        %420 = vmatpush1.bf16.msra.mxu0 %v417
        %421 = vmatprep.subr.bf16.mxu0 0
        %422 = vmatpush1.bf16.msra.mxu0 0
        %423 = vmatprep.subr.bf16.mxu0 0
        %424 = vmatpush1.bf16.msra.mxu0 0
        %425 = vmatprep.subr.bf16.mxu0 0
        %426 = vmatpush1.bf16.msra.mxu0 0
        %427 = vmatprep.subr.bf16.mxu0 0
        %428 = vmatpush1.bf16.msra.mxu0 0
        %429 = vmatprep.subr.bf16.mxu0 0
        %430 = vmatpush1.bf16.msra.mxu0 0
        %431 = vmatprep.subr.bf16.mxu0 0
        %432 = vmatpush1.bf16.msra.mxu0 0
        %433 = vmatprep.subr.bf16.mxu0 0
        %434 = vmatpush1.bf16.msra.mxu0 0
        %435 = vmatprep.subr.bf16.mxu0 0
        %436 = vmatpush1.bf16.msra.mxu0 0
        %437 = vmatprep.subr.bf16.mxu0 0
        %438 = vmatpush1.bf16.msra.mxu0 0
        %439 = vmatprep.subr.bf16.mxu0 0
        %440 = vmatpush1.bf16.msra.mxu0 0
        %441 = vmatprep.subr.bf16.mxu0 0
        %442 = vmatpush1.bf16.msra.mxu0 0
        %443 = vmatprep.subr.bf16.mxu0 0
        %444 = vmatpush1.bf16.msra.mxu0 0
        %445 = vmatprep.subr.bf16.mxu0 0
        %446 = vmatpush1.bf16.msra.mxu0 0
        %447 = vmatprep.subr.bf16.mxu0 0
        %448 = vmatpush1.bf16.msra.mxu0 0
        %449 = vmatprep.subr.bf16.mxu0 0
        %450 = vmatpush1.bf16.msra.mxu0 0
        %451 = vmatprep.mubr.bf16.mxu0 0
        %452 = vmatmul.mubr.bf16.gmra.mrb[0].mxu0 %v414
        %v453 = vpop.f32.mrb[0].mxu0
        %v454 = vadd.f32 %v411, %v453
        %v455 = vpop.f32.mrb[0].mxu0
        %v456 = vpop.f32.mrb[0].mxu0
        %v457 = vpop.f32.mrb[0].mxu0
        %458 = vdwg.mxu0
        %vm459 = vcmp.eq.s32.totalorder %v261, 1
        %v460 = vsel %vm459, %v454, -1e+30
        %v461 = vsel %vm269, %v460, -inf
        %462 = vmax.xlane.f32.xlu0 %v461
        %v463 = vpop.xlane.xlu0 %462
        %v464 = vsub.f32 %v460, %v463
        %v465 = vmul.f32 %v464, 1.442695
        %v466 = vpow.pop %v465
        %v467 = vsel %vm269, %v466, 0.0
        %468 = vadd.xlane.f32.xlu0 %v467
        %v469 = vpop.xlane.xlu0 %468
        %v470 = vrcp.pop %v469
        %v471 = vmul.f32 1.0, %v470
        %v472 = vmul.f32 %v466, %v267
        %v473 = vsel %vm269, %v472, 0.0
        %474 = vadd.xlane.f32.xlu0 %v473
        %v475 = vpop.xlane.xlu0 %474
        %v476 = vmul.f32 %v475, %v471
        %v477 = vsub.f32 %v267, %v476
        %v478 = vmul.f32 %v477, %v477
        %v479 = vmul.f32 %v466, %v478
        %v480 = vsel %vm269, %v479, 0.0
        %481 = vadd.xlane.f32.xlu0 %v480
        %v482 = vpop.xlane.xlu0 %481
        %v483 = vmul.f32 %v482, %v471
        %v484 = vmax.f32 %v483, 1e-12
        %v485 = vrsqrt.pop %v484
        %v486 = vmul.f32 %v484, %v485
        %vm487 = vcmp.eq.f32.partialorder %v484, inf
        %v488 = vsel %vm487, %v484, %v486
        %vm489 = vcmp.eq.f32.partialorder %v484, 0.0
        %v490 = vand.u32 %v484, 2147483648
        %v491 = vsel %vm489, %v490, %v488
        %vm492 = vcmask 7168
        %v493 = vsel %vm492, %v476, %v491
        %494 = vxpose.xlu0.b32.start [1/16] %v493, 128
        %495 = vxpose.xlu0.b32.cont [2/16] 0.0, 128
        %496 = vxpose.xlu0.b32.cont [3/16] 0.0, 128
        %497 = vxpose.xlu0.b32.cont [4/16] 0.0, 128
        %498 = vxpose.xlu0.b32.cont [5/16] 0.0, 128
        %499 = vxpose.xlu0.b32.cont [6/16] 0.0, 128
        %500 = vxpose.xlu0.b32.cont [7/16] 0.0, 128
        %501 = vxpose.xlu0.b32.cont [8/16] 0.0, 128
        %502 = vxpose.xlu0.b32.cont [9/16] 0.0, 128
        %503 = vxpose.xlu0.b32.cont [10/16] 0.0, 128
        %504 = vxpose.xlu0.b32.cont [11/16] 0.0, 128
        %505 = vxpose.xlu0.b32.cont [12/16] 0.0, 128
        %506 = vxpose.xlu0.b32.cont [13/16] 0.0, 128
        %507 = vxpose.xlu0.b32.cont [14/16] 0.0, 128
        %508 = vxpose.xlu0.b32.cont [15/16] 0.0, 128
        %509 = vxpose.xlu0.b32.end [16/16] 0.0, 128
        %v510 = vpop.trf.xlu0
        %v511 = vpop.trf.xlu0
        %v512 = vpop.trf.xlu0
        %v513 = vpop.trf.xlu0
        %v514 = vpop.trf.xlu0
        %v515 = vpop.trf.xlu0
        %v516 = vpop.trf.xlu0
        %v517 = vpop.trf.xlu0
        %v518 = vpop.trf.xlu0
        %v519 = vpop.trf.xlu0
        %v520 = vpop.trf.xlu0
        %v521 = vpop.trf.xlu0
        %v522 = vpop.trf.xlu0
        %v523 = vpop.trf.xlu0
        %v524 = vpop.trf.xlu0
        %v525 = vpop.trf.xlu0
        %vm526 = vcmask 25600
        %527 = vst.msk [vmem:[%s249] sm:$0x3] %vm526, %v510
        %s528 = sand.u32 %s166, 1
        %s529 = scalar_lea.sflag [#allocation5], %s528
        %s530 = sand.u32 %s166, 1
        %s531 = smul.addr %s530, 2
        %s532 = scalar_lea.vmem [#allocation4], %s531
        // Predicated region
        $region45: #{tpu_custom_call.1} parent=43 // pred_check
          %p533 = pneg %p176
        $region46: #{tpu_custom_call.1} parent=43 // pred_check_branch
          %535 = sbr.rel (%p533) target = $region48
        $region47: #{tpu_custom_call.1} parent=43 // pred_region
          %s537 = ssub.s32 32, 32
          %538 = vsyncadd %s529, %s537
          %s539 = smul.addr %s27, 32
          %s540 = scalar_lea.hbm %s7, %s539
          %s542 = sshll.u32 %s532, 4
          %s543 = int_to_ptr.vmem [resolvable:$true] %s542
          %545 = dma.vmem_to_hbm [thread:$0]  %s543, 32, %s540, %s529
        $region48: #{tpu_custom_call.1} parent=43 // pred_fallthru
          _
      $region44: #{tpu_custom_call.1} parent=5 // pred_fallthru
        _
      %p546 = scmp.le.s32.totalorder 2, %s22
      // Predicated region
      $region49: #{tpu_custom_call.1} parent=5 // pred_check
        %p547 = pneg %p546
      $region50: #{tpu_custom_call.1} parent=5 // pred_check_branch
        %549 = sbr.rel (%p547) target = $region52
      $region51: #{tpu_custom_call.1} parent=5 // pred_region
        %s550 = ssub.s32 %s22, 2
        // Predicated region
        $region53: #{tpu_custom_call.1} parent=51 // pred_check
          %p551 = pneg %p182
        $region54: #{tpu_custom_call.1} parent=51 // pred_check_branch
          %553 = sbr.rel (%p551) target = $region56
        $region55: #{tpu_custom_call.1} parent=51 // pred_region
          %s554 = sand.u32 %s167, 1
          %s555 = scalar_lea.sflag [#allocation5], %s554
          %s556 = sand.u32 %s167, 1
          %s557 = smul.addr %s556, 2
          %s558 = scalar_lea.vmem [#allocation4], %s557
          %559 = dma.done %s555, 32
        $region56: #{tpu_custom_call.1} parent=51 // pred_fallthru
          _
      $region52: #{tpu_custom_call.1} parent=5 // pred_fallthru
        _
    $region6: #{tpu_custom_call.1} parent=1 // loop_footer
      %s26 = sadd.s32 1, %s22
    $region7: #{tpu_custom_call.1} parent=1 // loop_footer_branch
      %21 = sbr.rel target = $region3
    $region8: #{tpu_custom_call.1} parent=1 // loop_exit
      _
    %560 = vsyncpa [#allocation5], 1
    %s561 = scalar_lea.sflag [#allocation5], 1
    %562 = vsyncpa %s561, 1

</llo_original>
